<compile_context>
chip_gen: v5e
topology: v5e:2x2
jax: 0.10.0
libtpu: 0.0.40
codegen_flags: <defaults>
</compile_context>

<pallas_src>
import jax
import jax.numpy as jnp
from jax import lax
from jax.experimental import pallas as pl
from jax.experimental.pallas import tpu as pltpu


# ----------------------------- Pallas kernel --------------------------------

def _deform_fused_kernel(cols_ref, wd_ref, shift_ref, o_ref):
    """Fused deformable-conv tile.

    cols  : (TM, KK*C) bf16 - pre-summed, bilinear-weighted im2col columns.
    wd    : (KK*C, C_out_p) bf16 - deform-conv weight with BN scale folded in (grid-invariant).
    shift : (1, C_out_p) f32 - BN shift (grid-invariant).
    """
    y = jnp.dot(cols_ref[...], wd_ref[...], preferred_element_type=jnp.float32)  # MXU
    y = y + shift_ref[...]                       # folded BatchNorm shift
    o_ref[...] = (y * jax.nn.sigmoid(y)).astype(o_ref.dtype)   # SiLU (EUP)


# ----------------------------- tiling heuristics ------------------------------

def _round_up(x, m):
    return ((x + m - 1) // m) * m


def _tpu_vmem_and_cores():
    """Generation query with safe fallbacks (128 MiB VMEM, 1 TensorCore)."""
    phys = 128 << 20
    cores = 1
    try:
        info = pltpu.get_tpu_info()
        phys = int(getattr(info, "vmem_capacity_bytes", phys) or phys)
        for name in ("num_tensorcores", "tensorcore_count", "num_cores",
                     "cores_per_chip", "core_count"):
            v = getattr(info, name, None)
            if v:
                cores = int(v)
                break
    except Exception:
        pass
    return phys, cores


def _pick_row_tile(M, kc, c_out_p):
    """Largest row tile that fits a generation-aware VMEM budget.

    Multi-TC chips (v7x) additionally require >= 2*num_cores grid steps so the grid splits
    evenly; single-TC chips (v5e/v6e) take the biggest tile (serial grid, per-step overhead).
    Prefers tiles that divide M so no ragged last block is needed.
    """
    phys, cores = _tpu_vmem_and_cores()
    budget = min(int(phys * 0.65), phys - (24 << 20))      # ~40 MiB on v7x, ~83 MiB on v5e/v6e

    def need(tm):
        return (2 * tm * kc * 2          # cols stream, double-buffered, bf16
                + 2 * tm * c_out_p * 4   # output tile, double-buffered, f32
                + 2 * kc * c_out_p * 2   # resident weight (double buffer still allocated)
                + 2 * 4 * c_out_p        # resident shift
                + tm * c_out_p * 4)      # in-kernel f32 matmul result

    candidates = [t for t in (2048, 1024, 512, 256, 128) if t <= max(128, _round_up(M, 8))]
    if not candidates:
        candidates = [128]
    fitting = [t for t in candidates if need(t) <= budget] or [candidates[-1]]

    min_steps = 2 * cores if cores > 1 else 1

    tm = None
    for t in fitting:                                      # divides M AND enough grid steps
        if pl.cdiv(M, t) >= min_steps and M % t == 0:
            tm = t
            break
    if tm is None:
        for t in fitting:                                  # enough grid steps (ragged last block)
            if pl.cdiv(M, t) >= min_steps:
                tm = t
                break
    if tm is None:                                         # tiny M: can't satisfy min_steps
        tm = fitting[-1] if min_steps > 1 else fitting[0]

    cap = min(phys - (16 << 20), 100 << 20)                # <=48 MiB on v7x, <=100 MiB elsewhere
    vmem_limit = int(min(max(need(tm) + (16 << 20), 32 << 20), cap))
    return tm, vmem_limit


# ----------------------------- Pallas wrapper --------------------------------

def _deform_fused_pallas(cols_bf16, wd_bf16, shift):
    M, KC = cols_bf16.shape
    C_out = wd_bf16.shape[1]

    # Lane-dense output (review item): pad C_out to a 128 multiple for unmasked vst / MXU fill,
    # but only when the f32 writeback inflation stays <= 2x (narrow outputs keep masked stores).
    C_out_p = C_out
    if C_out % 128 != 0 and C_out >= 64:
        C_out_p = _round_up(C_out, 128)
    if C_out_p != C_out:
        wd_bf16 = jnp.pad(wd_bf16, ((0, 0), (0, C_out_p - C_out)))
        shift = jnp.pad(shift, ((0, C_out_p - C_out),))

    tm, vmem_limit = _pick_row_tile(M, KC, C_out_p)
    grid = (pl.cdiv(M, tm),)          # ragged last block handled by Pallas; no jnp.pad of cols

    out = pl.pallas_call(
        _deform_fused_kernel,
        out_shape=jax.ShapeDtypeStruct((M, C_out_p), jnp.float32),
        grid=grid,
        in_specs=[pl.BlockSpec((tm, KC), lambda i: (i, 0)),          # streamed columns
                  pl.BlockSpec((KC, C_out_p), lambda i: (0, 0)),     # grid-invariant weight
                  pl.BlockSpec((1, C_out_p), lambda i: (0, 0))],     # grid-invariant BN shift
        out_specs=pl.BlockSpec((tm, C_out_p), lambda i: (i, 0)),
        compiler_params=pltpu.CompilerParams(
            dimension_semantics=("parallel",),
            vmem_limit_bytes=vmem_limit),
    )(cols_bf16, wd_bf16, shift.reshape(1, C_out_p))

    return out[:, :C_out] if C_out_p != C_out else out


# ----------------------------- JAX glue ---------------------------------------

def _offset_conv(x_nhwc, w_off, b_off, k, s, pad):
    """Standard k x k conv producing the 2*k*k offset channels (XLA native conv)."""
    w_hwio = jnp.transpose(w_off, (2, 3, 1, 0))   # (k, k, C_in, 2*k*k)
    y = lax.conv_general_dilated(
        x_nhwc, w_hwio, window_strides=(s, s),
        padding=((pad, pad), (pad, pad)),
        dimension_numbers=("NHWC", "HWIO", "NHWC"))
    return y + b_off.reshape(1, 1, 1, -1)


def _deform_sampling(x_nhwc, offset, k, s, pad):
    """Gather the 4 bilinear corners, fold the bilinear weights in, and pre-sum them.

    offset: (B, Ho, Wo, k*k, 2) with per-tap (dy, dx) - torchvision channel ordering.
    Returns ONE f32 array of shape (M, k*k*C): the fully-weighted, summed im2col columns
    (column order (kh, kw, c)); OOB handling follows torchvision deform_conv2d.
    """
    B, H, W, C = x_nhwc.shape
    _, Ho, Wo, KK, _ = offset.shape

    hs = (jnp.arange(Ho) * s - pad).astype(jnp.float32)
    ws = (jnp.arange(Wo) * s - pad).astype(jnp.float32)
    ii, jj = jnp.meshgrid(jnp.arange(k), jnp.arange(k), indexing="ij")
    tap_dy = ii.reshape(-1).astype(jnp.float32)
    tap_dx = jj.reshape(-1).astype(jnp.float32)

    py = hs[None, :, None, None] + tap_dy[None, None, None, :] + offset[..., 0]
    px = ws[None, None, :, None] + tap_dx[None, None, None, :] + offset[..., 1]

    # torchvision rule: whole sample zero outside (-1,H)x(-1,W); individual OOB corners zeroed.
    inside = (py > -1.0) & (py < H) & (px > -1.0) & (px < W)

    y0 = jnp.floor(py); x0 = jnp.floor(px)
    y1 = y0 + 1.0;      x1 = x0 + 1.0
    ly = py - y0;       lx = px - x0
    hy = 1.0 - ly;      hx = 1.0 - lx

    x_flat = x_nhwc.reshape(B * H * W, C)
    b_idx = jnp.arange(B, dtype=jnp.int32).reshape(B, 1, 1, 1)
    M = B * Ho * Wo

    def corner(yc, xc, wy, wx):
        valid = inside & (yc >= 0.0) & (yc <= H - 1.0) & (xc >= 0.0) & (xc <= W - 1.0)
        yi = jnp.clip(yc, 0.0, H - 1.0).astype(jnp.int32)
        xi = jnp.clip(xc, 0.0, W - 1.0).astype(jnp.int32)
        flat_idx = (b_idx * H + yi) * W + xi                  # (B, Ho, Wo, KK)
        vals = x_flat[flat_idx]                               # (B, Ho, Wo, KK, C) gather
        wgt = (wy * wx) * valid.astype(jnp.float32)
        return vals * wgt[..., None]

    # Pre-sum in f32 in glue (review item #1): the Pallas kernel streams a single array.
    cols = (corner(y0, x0, hy, hx) + corner(y0, x1, hy, lx)
            + corner(y1, x0, ly, hx) + corner(y1, x1, ly, lx))
    return cols.reshape(M, KK * C)


# -------------------------- Module-equivalent wrapper ------------------------

def deformable_conv_forward(x_nchw, params, k=3, s=1):
    """Equivalent of DeformableConv.forward (inference-mode BN; DCNv1, no modulation mask)."""
    pad = k // 2
    x = jnp.transpose(x_nchw, (0, 2, 3, 1)).astype(jnp.float32)   # NCHW -> NHWC
    B, H, W, C_in = x.shape

    # --- 1) offset conv ---
    offs = _offset_conv(x, params["w_off"], params["b_off"], k, s, pad)   # (B,Ho,Wo,2*k*k)
    _, Ho, Wo, _ = offs.shape
    offsets = offs.reshape(B, Ho, Wo, k * k, 2)                   # per-tap (dy, dx)

    # --- 2) deformable sampling glue (gather + weight fold + corner pre-sum) ---
    cols = _deform_sampling(x, offsets, k, s, pad)                # (M, k*k*C_in) f32
    cols_bf16 = cols.astype(jnp.bfloat16)                         # single bf16 stream

    # --- 3) fused deform-conv matmul + folded BN + SiLU (Pallas) ---
    C_out = params["w_def"].shape[0]
    wd = jnp.transpose(params["w_def"], (2, 3, 1, 0)).reshape(k * k * C_in, C_out)
    eps = 1e-5
    scale = params["gamma"] / jnp.sqrt(params["running_var"] + eps)
    shift = params["beta"] - params["running_mean"] * scale
    wd_bf16 = (wd * scale[None, :]).astype(jnp.bfloat16)          # BN scale folded into weight
    out = _deform_fused_pallas(cols_bf16, wd_bf16, shift)         # (M, C_out) f32

    out = out.reshape(B, Ho, Wo, C_out)
    return jnp.transpose(out, (0, 3, 1, 2))                       # NHWC -> NCHW


# -------------------------- Independent f32 reference ------------------------

def _reference_forward_independent(x_nchw, params, k=3, s=1):
    """Pure-jnp f32 reference that shares NO sampling code with the Pallas path.

    Uses a 1-pixel zero-padded image: for sampling points inside (-1,H)x(-1,W) this reproduces
    torchvision deform_conv2d's per-corner OOB zeroing exactly; samples fully outside are zeroed.
    """
    pad = k // 2
    x = jnp.transpose(x_nchw, (0, 2, 3, 1)).astype(jnp.float32)
    B, H, W, C = x.shape
    offs = _offset_conv(x, params["w_off"], params["b_off"], k, s, pad)
    _, Ho, Wo, _ = offs.shape
    off = offs.reshape(B, Ho, Wo, k * k, 2)

    xp = jnp.pad(x, ((0, 0), (1, 1), (1, 1), (0, 0)))             # zero border

    base_y = (jnp.arange(Ho) * s - pad).astype(jnp.float32)
    base_x = (jnp.arange(Wo) * s - pad).astype(jnp.float32)
    ky, kx = jnp.meshgrid(jnp.arange(k), jnp.arange(k), indexing="ij")
    py = base_y[None, :, None, None] + ky.reshape(-1).astype(jnp.float32)[None, None, None, :] \
        + off[..., 0]
    px = base_x[None, None, :, None] + kx.reshape(-1).astype(jnp.float32)[None, None, None, :] \
        + off[..., 1]

    inside = (py > -1.0) & (py < H) & (px > -1.0) & (px < W)
    y0 = jnp.floor(py)
    x0 = jnp.floor(px)
    b_idx = jnp.arange(B).reshape(B, 1, 1, 1)

    acc = jnp.zeros((B, Ho, Wo, k * k, C), jnp.float32)
    for dy in (0, 1):
        for dx in (0, 1):
            yc = y0 + dy
            xc = x0 + dx
            w = (1.0 - jnp.abs(py - yc)) * (1.0 - jnp.abs(px - xc))
            yi = jnp.clip(yc + 1.0, 0.0, float(H + 1)).astype(jnp.int32)
            xi = jnp.clip(xc + 1.0, 0.0, float(W + 1)).astype(jnp.int32)
            v = xp[b_idx, yi, xi]                                 # (B,Ho,Wo,KK,C)
            acc = acc + w[..., None] * v
    cols = jnp.where(inside[..., None], acc, 0.0).reshape(B * Ho * Wo, k * k * C)

    C_out = params["w_def"].shape[0]
    wd = jnp.transpose(params["w_def"], (2, 3, 1, 0)).reshape(k * k * C, C_out)
    scale = params["gamma"] / jnp.sqrt(params["running_var"] + 1e-5)
    shift = params["beta"] - params["running_mean"] * scale
    y = (cols @ wd) * scale[None, :] + shift[None, :]
    y = y * jax.nn.sigmoid(y)
    return jnp.transpose(y.reshape(B, Ho, Wo, C_out), (0, 3, 1, 2))


# ------------------------------------ setup ----------------------------------

def init_params(key, in_ch, out_ch, k=3):
    k1, k2, k3, k4, k5, k6, k7 = jax.random.split(key, 7)
    return {
        "w_off": 0.1 * jax.random.normal(k1, (2 * k * k, in_ch, k, k), jnp.float32),
        "b_off": 0.1 * jax.random.normal(k2, (2 * k * k,), jnp.float32),
        "w_def": 0.1 * jax.random.normal(k3, (out_ch, in_ch, k, k), jnp.float32),
        "gamma": 1.0 + 0.1 * jax.random.normal(k4, (out_ch,), jnp.float32),
        "beta": 0.1 * jax.random.normal(k5, (out_ch,), jnp.float32),
        "running_mean": 0.1 * jax.random.normal(k6, (out_ch,), jnp.float32),
        "running_var": jnp.abs(1.0 + 0.1 * jax.random.normal(k7, (out_ch,), jnp.float32)),
    }


if __name__ == "__main__":
    B, C_in, H, W = 2, 4, 16, 16
    C_out, K, S = 8, 3, 1

    key = jax.random.PRNGKey(0)
    kx, kp = jax.random.split(key)
    x = jax.random.normal(kx, (B, C_in, H, W), jnp.float32)        # NCHW input
    params = init_params(kp, C_in, C_out, K)

    fwd = jax.jit(lambda xx: deformable_conv_forward(xx, params, k=K, s=S))
    out = fwd(x)
    jax.block_until_ready(out)

    assert out.shape == (B, C_out, H, W)
    assert bool(jnp.isfinite(out).all())

    # Check against an INDEPENDENT pure-f32 reference (bf16 column/weight streams in the kernel).
    ref = _reference_forward_independent(x, params, k=K, s=S)
    err = float(jnp.max(jnp.abs(out - ref)))
    assert err < 5e-2, f"mismatch vs independent f32 reference: max abs err = {err}"

    print("KERNEL_OK")
</pallas_src>

<mosaic_0001>
module attributes {stable_mosaic.version = 11 : i64} {
  func.func @_deform_fused_kernel(%arg0: i32, %arg1: memref<512x36xbf16, #tpu.memory_space<vmem>>, %arg2: memref<36x8xbf16, #tpu.memory_space<vmem>>, %arg3: memref<1x8xf32, #tpu.memory_space<vmem>>, %arg4: memref<512x8xf32, #tpu.memory_space<vmem>>) attributes {dimension_semantics = [#tpu.dimension_semantics<parallel>], iteration_bounds = array<i64: 1>, scalar_prefetch = 0 : i64, scratch_operands = 0 : i64, tpu.core_type = #tpu.core_type<tc>, window_params = [{transform_indices = @transform_0, window_bounds = array<i64: 512, 36>}, {pipeline_mode = #tpu.pipeline_mode<synchronous>, transform_indices = @transform_1, window_bounds = array<i64: 36, 8>}, {pipeline_mode = #tpu.pipeline_mode<synchronous>, transform_indices = @transform_2, window_bounds = array<i64: 1, 8>}, {transform_indices = @transform_3, window_bounds = array<i64: 512, 8>}]} {
    %c0 = arith.constant 0 : index
    %c0_0 = arith.constant 0 : index
    %0 = vector.load %arg1[%c0, %c0_0] : memref<512x36xbf16, #tpu.memory_space<vmem>>, vector<512x36xbf16>
    %c0_1 = arith.constant 0 : index
    %c0_2 = arith.constant 0 : index
    %1 = vector.load %arg2[%c0_1, %c0_2] : memref<36x8xbf16, #tpu.memory_space<vmem>>, vector<36x8xbf16>
    %cst = arith.constant dense<0.000000e+00> : vector<512x8xf32>
    %2 = tpu.matmul %0, %1, %cst {dimension_numbers = #tpu.dot_dimension_numbers<[1], [0], [0], [1], [0, 0, 1, 1], [], []>} : vector<512x36xbf16>, vector<36x8xbf16>, vector<512x8xf32> -> vector<512x8xf32>
    %c0_3 = arith.constant 0 : index
    %c0_4 = arith.constant 0 : index
    %3 = vector.load %arg3[%c0_3, %c0_4] : memref<1x8xf32, #tpu.memory_space<vmem>>, vector<1x8xf32>
    %4 = vector.broadcast %3 : vector<1x8xf32> to vector<512x8xf32>
    %5 = arith.addf %2, %4 : vector<512x8xf32>
    %6 = arith.negf %5 : vector<512x8xf32>
    %7 = math.exp %6 : vector<512x8xf32>
    %cst_5 = arith.constant 1.000000e+00 : f32
    %8 = vector.broadcast %cst_5 : f32 to vector<512x8xf32>
    %9 = arith.addf %8, %7 : vector<512x8xf32>
    %10 = arith.divf %8, %9 : vector<512x8xf32>
    %11 = arith.mulf %5, %10 : vector<512x8xf32>
    %c0_6 = arith.constant 0 : index
    %c0_7 = arith.constant 0 : index
    %12 = vector.load %arg4[%c0_6, %c0_7] : memref<512x8xf32, #tpu.memory_space<vmem>>, vector<512x8xf32>
    tpu.vector_store %arg4[%c0_6, %c0_7], %11 {strides = array<i32>} : memref<512x8xf32, #tpu.memory_space<vmem>>, vector<512x8xf32>,
    return
  }
  func.func @transform_0(%arg0: i32) -> (i32, i32) {
    %c0_i32 = arith.constant 0 : i32
    %c0_i32_0 = arith.constant 0 : i32
    return %arg0, %c0_i32 : i32, i32
  }
  func.func @transform_1(%arg0: i32) -> (i32, i32) {
    %c0_i32 = arith.constant 0 : i32
    %c0_i32_0 = arith.constant 0 : i32
    %c0_i32_1 = arith.constant 0 : i32
    return %c0_i32, %c0_i32_0 : i32, i32
  }
  func.func @transform_2(%arg0: i32) -> (i32, i32) {
    %c0_i32 = arith.constant 0 : i32
    %c0_i32_0 = arith.constant 0 : i32
    %c0_i32_1 = arith.constant 0 : i32
    return %c0_i32, %c0_i32_0 : i32, i32
  }
  func.func @transform_3(%arg0: i32) -> (i32, i32) {
    %c0_i32 = arith.constant 0 : i32
    %c0_i32_0 = arith.constant 0 : i32
    return %arg0, %c0_i32 : i32, i32
  }
}

</mosaic_0001>

<llo_original>
// kernel: _lambda_.1
$region0: #{_lambda_.1}
  #allocation0 [shape = 'u32[]', space=smem, size = 0x4, offset = 0x4, fixed_abs, tag = 'smem constant byte address 0x4 - core index']
  #allocation1 [shape = 'u32[72,128]{1,0:T(1,128)}', space=vmem, size = 0x9000, scoped, tag = 'internal scratch']
  %s0 = inlined_call_operand.vmem [shape: bf16[512,36], index: 0, kind: input, shape index: {}]
  %s1 = inlined_call_operand.vmem [shape: bf16[36,8], index: 1, kind: input, shape index: {}]
  %s2 = inlined_call_operand.vmem [shape: f32[1,8], index: 2, kind: input, shape index: {}]
  %s3 = inlined_call_operand.vmem [shape: f32[512,8], index: 3, kind: output, shape index: {}]
  %s4 = sld [smem:[#allocation0]]
  $region22: #{_lambda_.1} parent=0
    _
  %s6 = ssub.s32 1, %s4
  %s7 = scalar_select 0, %s6, %s4
  // Predicated region
  $region2: #{_lambda_.1} parent=0 // pred_check
    _
  $region3: #{_lambda_.1} parent=0 // pred_check_branch
    %9 = sbr.rel (0) target = $region5
  $region4: #{_lambda_.1} parent=0 // pred_region
    _
  $region5: #{_lambda_.1} parent=0 // pred_fallthru
    _
  // Predicated region
  $region6: #{_lambda_.1} parent=0 // pred_check
    _
  $region7: #{_lambda_.1} parent=0 // pred_check_branch
    %11 = sbr.rel (0) target = $region9
  $region8: #{_lambda_.1} parent=0 // pred_region
    _
  $region9: #{_lambda_.1} parent=0 // pred_fallthru
    _
  // Predicated region
  $region10: #{_lambda_.1} parent=0 // pred_check
    _
  $region11: #{_lambda_.1} parent=0 // pred_check_branch
    %13 = sbr.rel (0) target = $region13
  $region12: #{_lambda_.1} parent=0 // pred_region
    _
  $region13: #{_lambda_.1} parent=0 // pred_fallthru
    _
  %v15 = vld [vmem:[%s0] sm:$0xf]
  %v16 = vld [vmem:[%s0 + $0x4] sm:$0xf]
  %v17 = vld [vmem:[%s0 + $0x8] sm:$0xf]
  %v18 = vld [vmem:[%s0 + $0xc] sm:$0xf]
  %v19 = vld [vmem:[%s0 + $0x10] sm:$0xf]
  %v20 = vld [vmem:[%s0 + $0x14] sm:$0xf]
  %v21 = vld [vmem:[%s0 + $0x18] sm:$0xf]
  %v22 = vld [vmem:[%s0 + $0x1c] sm:$0xf]
  %v23 = vld [vmem:[%s0 + $0x20] sm:$0xf]
  %v24 = vld [vmem:[%s0 + $0x24] sm:$0xf]
  %v25 = vld [vmem:[%s0 + $0x28] sm:$0xf]
  %v26 = vld [vmem:[%s0 + $0x2c] sm:$0xf]
  %v27 = vld [vmem:[%s0 + $0x30] sm:$0xf]
  %v28 = vld [vmem:[%s0 + $0x34] sm:$0xf]
  %v29 = vld [vmem:[%s0 + $0x38] sm:$0xf]
  %v30 = vld [vmem:[%s0 + $0x3c] sm:$0xf]
  %v31 = vld [vmem:[%s0 + $0x40] sm:$0xf]
  %v32 = vld [vmem:[%s0 + $0x44] sm:$0xf]
  %v33 = vld [vmem:[%s0 + $0x48] sm:$0xf]
  %v34 = vld [vmem:[%s0 + $0x4c] sm:$0xf]
  %v35 = vld [vmem:[%s0 + $0x50] sm:$0xf]
  %v36 = vld [vmem:[%s0 + $0x54] sm:$0xf]
  %v37 = vld [vmem:[%s0 + $0x58] sm:$0xf]
  %v38 = vld [vmem:[%s0 + $0x5c] sm:$0xf]
  %v39 = vld [vmem:[%s0 + $0x60] sm:$0xf]
  %v40 = vld [vmem:[%s0 + $0x64] sm:$0xf]
  %v41 = vld [vmem:[%s0 + $0x68] sm:$0xf]
  %v42 = vld [vmem:[%s0 + $0x6c] sm:$0xf]
  %v43 = vld [vmem:[%s0 + $0x70] sm:$0xf]
  %v44 = vld [vmem:[%s0 + $0x74] sm:$0xf]
  %v45 = vld [vmem:[%s0 + $0x78] sm:$0xf]
  %v46 = vld [vmem:[%s0 + $0x7c] sm:$0xf]
  %v47 = vld [vmem:[%s0 + $0x80] sm:$0xf]
  %v48 = vld [vmem:[%s0 + $0x84] sm:$0xf]
  %v49 = vld [vmem:[%s0 + $0x88] sm:$0xf]
  %v50 = vld [vmem:[%s0 + $0x8c] sm:$0xf]
  %v51 = vld [vmem:[%s0 + $0x90] sm:$0xf]
  %v52 = vld [vmem:[%s0 + $0x94] sm:$0xf]
  %v53 = vld [vmem:[%s0 + $0x98] sm:$0xf]
  %v54 = vld [vmem:[%s0 + $0x9c] sm:$0xf]
  %v55 = vld [vmem:[%s0 + $0xa0] sm:$0xf]
  %v56 = vld [vmem:[%s0 + $0xa4] sm:$0xf]
  %v57 = vld [vmem:[%s0 + $0xa8] sm:$0xf]
  %v58 = vld [vmem:[%s0 + $0xac] sm:$0xf]
  %v59 = vld [vmem:[%s0 + $0xb0] sm:$0xf]
  %v60 = vld [vmem:[%s0 + $0xb4] sm:$0xf]
  %v61 = vld [vmem:[%s0 + $0xb8] sm:$0xf]
  %v62 = vld [vmem:[%s0 + $0xbc] sm:$0xf]
  %v63 = vld [vmem:[%s0 + $0xc0] sm:$0xf]
  %v64 = vld [vmem:[%s0 + $0xc4] sm:$0xf]
  %v65 = vld [vmem:[%s0 + $0xc8] sm:$0xf]
  %v66 = vld [vmem:[%s0 + $0xcc] sm:$0xf]
  %v67 = vld [vmem:[%s0 + $0xd0] sm:$0xf]
  %v68 = vld [vmem:[%s0 + $0xd4] sm:$0xf]
  %v69 = vld [vmem:[%s0 + $0xd8] sm:$0xf]
  %v70 = vld [vmem:[%s0 + $0xdc] sm:$0xf]
  %v71 = vld [vmem:[%s0 + $0xe0] sm:$0xf]
  %v72 = vld [vmem:[%s0 + $0xe4] sm:$0xf]
  %v73 = vld [vmem:[%s0 + $0xe8] sm:$0xf]
  %v74 = vld [vmem:[%s0 + $0xec] sm:$0xf]
  %v75 = vld [vmem:[%s0 + $0xf0] sm:$0xf]
  %v76 = vld [vmem:[%s0 + $0xf4] sm:$0xf]
  %v77 = vld [vmem:[%s0 + $0xf8] sm:$0xf]
  %v78 = vld [vmem:[%s0 + $0xfc] sm:$0xf]
  %v79 = vld [vmem:[%s1] sm:$0xf]
  %v80 = vld [vmem:[%s1 + $0x4] sm:$0xf]
  %v81 = vld [vmem:[%s1 + $0x8] sm:$0xf]
  %v82 = vld [vmem:[%s1 + $0xc] sm:$0xf]
  %v83 = vld [vmem:[%s1 + $0x10] sm:$0x3]
  %v84 = vld [vmem:[%s2] sm:$0x1]
  %v86 = vperm.slane %v84, 0
  %v152 = vunpack.c.l.b16 %v15
  %v153 = vunpack.c.l.b16 %v16
  %v154 = vunpack.c.l.b16 %v17
  %v155 = vunpack.c.l.b16 %v18
  %v156 = vunpack.c.l.b16 %v19
  %v157 = vunpack.c.l.b16 %v20
  %v158 = vunpack.c.l.b16 %v21
  %v159 = vunpack.c.l.b16 %v22
  %v160 = vunpack.c.l.b16 %v23
  %v161 = vunpack.c.l.b16 %v24
  %v162 = vunpack.c.l.b16 %v25
  %v163 = vunpack.c.l.b16 %v26
  %v164 = vunpack.c.l.b16 %v27
  %v165 = vunpack.c.l.b16 %v28
  %v166 = vunpack.c.l.b16 %v29
  %v167 = vunpack.c.l.b16 %v30
  %v168 = vunpack.c.l.b16 %v31
  %v169 = vunpack.c.l.b16 %v32
  %v170 = vunpack.c.l.b16 %v33
  %v171 = vunpack.c.l.b16 %v34
  %v172 = vunpack.c.l.b16 %v35
  %v173 = vunpack.c.l.b16 %v36
  %v174 = vunpack.c.l.b16 %v37
  %v175 = vunpack.c.l.b16 %v38
  %v176 = vunpack.c.l.b16 %v39
  %v177 = vunpack.c.l.b16 %v40
  %v178 = vunpack.c.l.b16 %v41
  %v179 = vunpack.c.l.b16 %v42
  %v180 = vunpack.c.l.b16 %v43
  %v181 = vunpack.c.l.b16 %v44
  %v182 = vunpack.c.l.b16 %v45
  %v183 = vunpack.c.l.b16 %v46
  %v184 = vunpack.c.l.b16 %v47
  %v185 = vunpack.c.l.b16 %v48
  %v186 = vunpack.c.l.b16 %v49
  %v187 = vunpack.c.l.b16 %v50
  %v188 = vunpack.c.l.b16 %v51
  %v189 = vunpack.c.l.b16 %v52
  %v190 = vunpack.c.l.b16 %v53
  %v191 = vunpack.c.l.b16 %v54
  %v192 = vunpack.c.l.b16 %v55
  %v193 = vunpack.c.l.b16 %v56
  %v194 = vunpack.c.l.b16 %v57
  %v195 = vunpack.c.l.b16 %v58
  %v196 = vunpack.c.l.b16 %v59
  %v197 = vunpack.c.l.b16 %v60
  %v198 = vunpack.c.l.b16 %v61
  %v199 = vunpack.c.l.b16 %v62
  %v200 = vunpack.c.l.b16 %v63
  %v201 = vunpack.c.l.b16 %v64
  %v202 = vunpack.c.l.b16 %v65
  %v203 = vunpack.c.l.b16 %v66
  %v204 = vunpack.c.l.b16 %v67
  %v205 = vunpack.c.l.b16 %v68
  %v206 = vunpack.c.l.b16 %v69
  %v207 = vunpack.c.l.b16 %v70
  %v208 = vunpack.c.l.b16 %v71
  %v209 = vunpack.c.l.b16 %v72
  %v210 = vunpack.c.l.b16 %v73
  %v211 = vunpack.c.l.b16 %v74
  %v212 = vunpack.c.l.b16 %v75
  %v213 = vunpack.c.l.b16 %v76
  %v214 = vunpack.c.l.b16 %v77
  %v215 = vunpack.c.l.b16 %v78
  %v216 = vpack.c.b16 %v153, %v152
  %v217 = vpack.c.b16 %v155, %v154
  %v218 = vpack.c.b16 %v157, %v156
  %v219 = vpack.c.b16 %v159, %v158
  %v220 = vpack.c.b16 %v161, %v160
  %v221 = vpack.c.b16 %v163, %v162
  %v222 = vpack.c.b16 %v165, %v164
  %v223 = vpack.c.b16 %v167, %v166
  %v224 = vpack.c.b16 %v169, %v168
  %v225 = vpack.c.b16 %v171, %v170
  %v226 = vpack.c.b16 %v173, %v172
  %v227 = vpack.c.b16 %v175, %v174
  %v228 = vpack.c.b16 %v177, %v176
  %v229 = vpack.c.b16 %v179, %v178
  %v230 = vpack.c.b16 %v181, %v180
  %v231 = vpack.c.b16 %v183, %v182
  %v232 = vpack.c.b16 %v185, %v184
  %v233 = vpack.c.b16 %v187, %v186
  %v234 = vpack.c.b16 %v189, %v188
  %v235 = vpack.c.b16 %v191, %v190
  %v236 = vpack.c.b16 %v193, %v192
  %v237 = vpack.c.b16 %v195, %v194
  %v238 = vpack.c.b16 %v197, %v196
  %v239 = vpack.c.b16 %v199, %v198
  %v240 = vpack.c.b16 %v201, %v200
  %v241 = vpack.c.b16 %v203, %v202
  %v242 = vpack.c.b16 %v205, %v204
  %v243 = vpack.c.b16 %v207, %v206
  %v244 = vpack.c.b16 %v209, %v208
  %v245 = vpack.c.b16 %v211, %v210
  %v246 = vpack.c.b16 %v213, %v212
  %v247 = vpack.c.b16 %v215, %v214
  %v253 = vunpack.c.l.b16 %v79
  %v254 = vunpack.c.l.b16 %v80
  %v255 = vunpack.c.l.b16 %v81
  %v256 = vunpack.c.l.b16 %v82
  %v257 = vunpack.c.l.b16 %v83
  %v258 = vpack.c.b16 %v254, %v253
  %v259 = vpack.c.b16 %v256, %v255
  %v260 = vpack.c.b16 %v257, %v257
  %vm263 = vcmask 293888
  %v265 = vsel %vm263, %v216, 0
  %v268 = vsel %vm263, %v217, 0
  %v271 = vsel %vm263, %v218, 0
  %v274 = vsel %vm263, %v219, 0
  %v277 = vsel %vm263, %v220, 0
  %v280 = vsel %vm263, %v221, 0
  %v283 = vsel %vm263, %v222, 0
  %v286 = vsel %vm263, %v223, 0
  %v289 = vsel %vm263, %v224, 0
  %v292 = vsel %vm263, %v225, 0
  %v295 = vsel %vm263, %v226, 0
  %v298 = vsel %vm263, %v227, 0
  %v301 = vsel %vm263, %v228, 0
  %v304 = vsel %vm263, %v229, 0
  %v307 = vsel %vm263, %v230, 0
  %v310 = vsel %vm263, %v231, 0
  %v313 = vsel %vm263, %v232, 0
  %v316 = vsel %vm263, %v233, 0
  %v319 = vsel %vm263, %v234, 0
  %v322 = vsel %vm263, %v235, 0
  %v325 = vsel %vm263, %v236, 0
  %v328 = vsel %vm263, %v237, 0
  %v331 = vsel %vm263, %v238, 0
  %v334 = vsel %vm263, %v239, 0
  %v337 = vsel %vm263, %v240, 0
  %v340 = vsel %vm263, %v241, 0
  %v343 = vsel %vm263, %v242, 0
  %v346 = vsel %vm263, %v243, 0
  %v349 = vsel %vm263, %v244, 0
  %v352 = vsel %vm263, %v245, 0
  %v355 = vsel %vm263, %v246, 0
  %v358 = vsel %vm263, %v247, 0
  %vm360 = vcmask 1041408
  %v362 = vsel %vm360, %v260, 0
  %364 = vmatpush.bf16.msra.mxu0 0
  %365 = vmatpush.bf16.msra.mxu0 0
  %366 = vmatpush.bf16.msra.mxu0 0
  %367 = vmatpush.bf16.msra.mxu0 0
  %368 = vmatpush.bf16.msra.mxu0 0
  %369 = vmatpush.bf16.msra.mxu0 %v362
  %370 = vmatpush.bf16.msra.mxu0 %v259
  %371 = vmatpush.bf16.msra.mxu0 %v258
  %372 = vmatmul.bf16.gmra.mxu0 %v265
  %v373 = vpop.f32.mrf.mxu0
  %v374 = vadd.f32 %v86, %v373
  %v375 = vpop.f32.mrf.mxu0
  %v376 = vadd.f32 %v86, %v375
  %377 = vmatmul.bf16.gmra.mxu0 %v268
  %v378 = vpop.f32.mrf.mxu0
  %v379 = vadd.f32 %v86, %v378
  %v380 = vpop.f32.mrf.mxu0
  %v381 = vadd.f32 %v86, %v380
  %382 = vmatmul.bf16.gmra.mxu0 %v271
  %v383 = vpop.f32.mrf.mxu0
  %v384 = vadd.f32 %v86, %v383
  %v385 = vpop.f32.mrf.mxu0
  %v386 = vadd.f32 %v86, %v385
  %387 = vmatmul.bf16.gmra.mxu0 %v274
  %v388 = vpop.f32.mrf.mxu0
  %v389 = vadd.f32 %v86, %v388
  %v390 = vpop.f32.mrf.mxu0
  %v391 = vadd.f32 %v86, %v390
  %392 = vmatmul.bf16.gmra.mxu0 %v277
  %v393 = vpop.f32.mrf.mxu0
  %v394 = vadd.f32 %v86, %v393
  %v395 = vpop.f32.mrf.mxu0
  %v396 = vadd.f32 %v86, %v395
  %397 = vmatmul.bf16.gmra.mxu0 %v280
  %v398 = vpop.f32.mrf.mxu0
  %v399 = vadd.f32 %v86, %v398
  %v400 = vpop.f32.mrf.mxu0
  %v401 = vadd.f32 %v86, %v400
  %402 = vmatmul.bf16.gmra.mxu0 %v283
  %v403 = vpop.f32.mrf.mxu0
  %v404 = vadd.f32 %v86, %v403
  %v405 = vpop.f32.mrf.mxu0
  %v406 = vadd.f32 %v86, %v405
  %407 = vmatmul.bf16.gmra.mxu0 %v286
  %v408 = vpop.f32.mrf.mxu0
  %v409 = vadd.f32 %v86, %v408
  %v410 = vpop.f32.mrf.mxu0
  %v411 = vadd.f32 %v86, %v410
  %412 = vmatmul.bf16.gmra.mxu0 %v289
  %v413 = vpop.f32.mrf.mxu0
  %v414 = vadd.f32 %v86, %v413
  %v415 = vpop.f32.mrf.mxu0
  %v416 = vadd.f32 %v86, %v415
  %417 = vmatmul.bf16.gmra.mxu0 %v292
  %v418 = vpop.f32.mrf.mxu0
  %v419 = vadd.f32 %v86, %v418
  %v420 = vpop.f32.mrf.mxu0
  %v421 = vadd.f32 %v86, %v420
  %422 = vmatmul.bf16.gmra.mxu0 %v295
  %v423 = vpop.f32.mrf.mxu0
  %v424 = vadd.f32 %v86, %v423
  %v425 = vpop.f32.mrf.mxu0
  %v426 = vadd.f32 %v86, %v425
  %427 = vmatmul.bf16.gmra.mxu0 %v298
  %v428 = vpop.f32.mrf.mxu0
  %v429 = vadd.f32 %v86, %v428
  %v430 = vpop.f32.mrf.mxu0
  %v431 = vadd.f32 %v86, %v430
  %432 = vmatmul.bf16.gmra.mxu0 %v301
  %v433 = vpop.f32.mrf.mxu0
  %v434 = vadd.f32 %v86, %v433
  %v435 = vpop.f32.mrf.mxu0
  %v436 = vadd.f32 %v86, %v435
  %437 = vmatmul.bf16.gmra.mxu0 %v304
  %v438 = vpop.f32.mrf.mxu0
  %v439 = vadd.f32 %v86, %v438
  %v440 = vpop.f32.mrf.mxu0
  %v441 = vadd.f32 %v86, %v440
  %442 = vmatmul.bf16.gmra.mxu0 %v307
  %v443 = vpop.f32.mrf.mxu0
  %v444 = vadd.f32 %v86, %v443
  %v445 = vpop.f32.mrf.mxu0
  %v446 = vadd.f32 %v86, %v445
  %447 = vmatmul.bf16.gmra.mxu0 %v310
  %v448 = vpop.f32.mrf.mxu0
  %v449 = vadd.f32 %v86, %v448
  %v450 = vpop.f32.mrf.mxu0
  %v451 = vadd.f32 %v86, %v450
  %452 = vmatmul.bf16.gmra.mxu0 %v313
  %v453 = vpop.f32.mrf.mxu0
  %v454 = vadd.f32 %v86, %v453
  %v455 = vpop.f32.mrf.mxu0
  %v456 = vadd.f32 %v86, %v455
  %457 = vmatmul.bf16.gmra.mxu0 %v316
  %v458 = vpop.f32.mrf.mxu0
  %v459 = vadd.f32 %v86, %v458
  %v460 = vpop.f32.mrf.mxu0
  %v461 = vadd.f32 %v86, %v460
  %462 = vmatmul.bf16.gmra.mxu0 %v319
  %v463 = vpop.f32.mrf.mxu0
  %v464 = vadd.f32 %v86, %v463
  %v465 = vpop.f32.mrf.mxu0
  %v466 = vadd.f32 %v86, %v465
  %467 = vmatmul.bf16.gmra.mxu0 %v322
  %v468 = vpop.f32.mrf.mxu0
  %v469 = vadd.f32 %v86, %v468
  %v470 = vpop.f32.mrf.mxu0
  %v471 = vadd.f32 %v86, %v470
  %472 = vmatmul.bf16.gmra.mxu0 %v325
  %v473 = vpop.f32.mrf.mxu0
  %v474 = vadd.f32 %v86, %v473
  %v475 = vpop.f32.mrf.mxu0
  %v476 = vadd.f32 %v86, %v475
  %477 = vmatmul.bf16.gmra.mxu0 %v328
  %v478 = vpop.f32.mrf.mxu0
  %v479 = vadd.f32 %v86, %v478
  %v480 = vpop.f32.mrf.mxu0
  %v481 = vadd.f32 %v86, %v480
  %482 = vmatmul.bf16.gmra.mxu0 %v331
  %v483 = vpop.f32.mrf.mxu0
  %v484 = vadd.f32 %v86, %v483
  %v485 = vpop.f32.mrf.mxu0
  %v486 = vadd.f32 %v86, %v485
  %487 = vmatmul.bf16.gmra.mxu0 %v334
  %v488 = vpop.f32.mrf.mxu0
  %v489 = vadd.f32 %v86, %v488
  %v490 = vpop.f32.mrf.mxu0
  %v491 = vadd.f32 %v86, %v490
  %492 = vmatmul.bf16.gmra.mxu0 %v337
  %v493 = vpop.f32.mrf.mxu0
  %v494 = vadd.f32 %v86, %v493
  %v495 = vpop.f32.mrf.mxu0
  %v496 = vadd.f32 %v86, %v495
  %497 = vmatmul.bf16.gmra.mxu0 %v340
  %v498 = vpop.f32.mrf.mxu0
  %v499 = vadd.f32 %v86, %v498
  %v500 = vpop.f32.mrf.mxu0
  %v501 = vadd.f32 %v86, %v500
  %502 = vmatmul.bf16.gmra.mxu0 %v343
  %v503 = vpop.f32.mrf.mxu0
  %v504 = vadd.f32 %v86, %v503
  %v505 = vpop.f32.mrf.mxu0
  %v506 = vadd.f32 %v86, %v505
  %507 = vmatmul.bf16.gmra.mxu0 %v346
  %v508 = vpop.f32.mrf.mxu0
  %v509 = vadd.f32 %v86, %v508
  %v510 = vpop.f32.mrf.mxu0
  %v511 = vadd.f32 %v86, %v510
  %512 = vmatmul.bf16.gmra.mxu0 %v349
  %v513 = vpop.f32.mrf.mxu0
  %v514 = vadd.f32 %v86, %v513
  %v515 = vpop.f32.mrf.mxu0
  %v516 = vadd.f32 %v86, %v515
  %517 = vmatmul.bf16.gmra.mxu0 %v352
  %v518 = vpop.f32.mrf.mxu0
  %v519 = vadd.f32 %v86, %v518
  %v520 = vpop.f32.mrf.mxu0
  %v521 = vadd.f32 %v86, %v520
  %522 = vmatmul.bf16.gmra.mxu0 %v355
  %v523 = vpop.f32.mrf.mxu0
  %v524 = vadd.f32 %v86, %v523
  %v525 = vpop.f32.mrf.mxu0
  %v526 = vadd.f32 %v86, %v525
  %527 = vmatmul.bf16.gmra.mxu0 %v358
  %v528 = vpop.f32.mrf.mxu0
  %v529 = vadd.f32 %v86, %v528
  %v530 = vpop.f32.mrf.mxu0
  %v531 = vadd.f32 %v86, %v530
  %532 = vdwg.mxu0
  %v533 = vxor.u32 %v374, 2147483648
  %v534 = vxor.u32 %v376, 2147483648
  %v535 = vxor.u32 %v379, 2147483648
  %v536 = vxor.u32 %v381, 2147483648
  %v537 = vxor.u32 %v384, 2147483648
  %v538 = vxor.u32 %v386, 2147483648
  %v539 = vxor.u32 %v389, 2147483648
  %v540 = vxor.u32 %v391, 2147483648
  %v541 = vxor.u32 %v394, 2147483648
  %v542 = vxor.u32 %v396, 2147483648
  %v543 = vxor.u32 %v399, 2147483648
  %v544 = vxor.u32 %v401, 2147483648
  %v545 = vxor.u32 %v404, 2147483648
  %v546 = vxor.u32 %v406, 2147483648
  %v547 = vxor.u32 %v409, 2147483648
  %v548 = vxor.u32 %v411, 2147483648
  %v549 = vxor.u32 %v414, 2147483648
  %v550 = vxor.u32 %v416, 2147483648
  %v551 = vxor.u32 %v419, 2147483648
  %v552 = vxor.u32 %v421, 2147483648
  %v553 = vxor.u32 %v424, 2147483648
  %v554 = vxor.u32 %v426, 2147483648
  %v555 = vxor.u32 %v429, 2147483648
  %v556 = vxor.u32 %v431, 2147483648
  %v557 = vxor.u32 %v434, 2147483648
  %v558 = vxor.u32 %v436, 2147483648
  %v559 = vxor.u32 %v439, 2147483648
  %v560 = vxor.u32 %v441, 2147483648
  %v561 = vxor.u32 %v444, 2147483648
  %v562 = vxor.u32 %v446, 2147483648
  %v563 = vxor.u32 %v449, 2147483648
  %v564 = vxor.u32 %v451, 2147483648
  %v565 = vxor.u32 %v454, 2147483648
  %v566 = vxor.u32 %v456, 2147483648
  %v567 = vxor.u32 %v459, 2147483648
  %v568 = vxor.u32 %v461, 2147483648
  %v569 = vxor.u32 %v464, 2147483648
  %v570 = vxor.u32 %v466, 2147483648
  %v571 = vxor.u32 %v469, 2147483648
  %v572 = vxor.u32 %v471, 2147483648
  %v573 = vxor.u32 %v474, 2147483648
  %v574 = vxor.u32 %v476, 2147483648
  %v575 = vxor.u32 %v479, 2147483648
  %v576 = vxor.u32 %v481, 2147483648
  %v577 = vxor.u32 %v484, 2147483648
  %v578 = vxor.u32 %v486, 2147483648
  %v579 = vxor.u32 %v489, 2147483648
  %v580 = vxor.u32 %v491, 2147483648
  %v581 = vxor.u32 %v494, 2147483648
  %v582 = vxor.u32 %v496, 2147483648
  %v583 = vxor.u32 %v499, 2147483648
  %v584 = vxor.u32 %v501, 2147483648
  %v585 = vxor.u32 %v504, 2147483648
  %v586 = vxor.u32 %v506, 2147483648
  %v587 = vxor.u32 %v509, 2147483648
  %v588 = vxor.u32 %v511, 2147483648
  %v589 = vxor.u32 %v514, 2147483648
  %v590 = vxor.u32 %v516, 2147483648
  %v591 = vxor.u32 %v519, 2147483648
  %v592 = vxor.u32 %v521, 2147483648
  %v593 = vxor.u32 %v524, 2147483648
  %v594 = vxor.u32 %v526, 2147483648
  %v595 = vxor.u32 %v529, 2147483648
  %v596 = vxor.u32 %v531, 2147483648
  %v597 = vmul.f32 %v533, 1.442695
  %v598 = vpow.pop %v597
  %v599 = vmul.f32 %v534, 1.442695
  %v600 = vpow.pop %v599
  %v601 = vmul.f32 %v535, 1.442695
  %v602 = vpow.pop %v601
  %v603 = vmul.f32 %v536, 1.442695
  %v604 = vpow.pop %v603
  %v605 = vmul.f32 %v537, 1.442695
  %v606 = vpow.pop %v605
  %v607 = vmul.f32 %v538, 1.442695
  %v608 = vpow.pop %v607
  %v609 = vmul.f32 %v539, 1.442695
  %v610 = vpow.pop %v609
  %v611 = vmul.f32 %v540, 1.442695
  %v612 = vpow.pop %v611
  %v613 = vmul.f32 %v541, 1.442695
  %v614 = vpow.pop %v613
  %v615 = vmul.f32 %v542, 1.442695
  %v616 = vpow.pop %v615
  %v617 = vmul.f32 %v543, 1.442695
  %v618 = vpow.pop %v617
  %v619 = vmul.f32 %v544, 1.442695
  %v620 = vpow.pop %v619
  %v621 = vmul.f32 %v545, 1.442695
  %v622 = vpow.pop %v621
  %v623 = vmul.f32 %v546, 1.442695
  %v624 = vpow.pop %v623
  %v625 = vmul.f32 %v547, 1.442695
  %v626 = vpow.pop %v625
  %v627 = vmul.f32 %v548, 1.442695
  %v628 = vpow.pop %v627
  %v629 = vmul.f32 %v549, 1.442695
  %v630 = vpow.pop %v629
  %v631 = vmul.f32 %v550, 1.442695
  %v632 = vpow.pop %v631
  %v633 = vmul.f32 %v551, 1.442695
  %v634 = vpow.pop %v633
  %v635 = vmul.f32 %v552, 1.442695
  %v636 = vpow.pop %v635
  %v637 = vmul.f32 %v553, 1.442695
  %v638 = vpow.pop %v637
  %v639 = vmul.f32 %v554, 1.442695
  %v640 = vpow.pop %v639
  %v641 = vmul.f32 %v555, 1.442695
  %v642 = vpow.pop %v641
  %v643 = vmul.f32 %v556, 1.442695
  %v644 = vpow.pop %v643
  %v645 = vmul.f32 %v557, 1.442695
  %v646 = vpow.pop %v645
  %v647 = vmul.f32 %v558, 1.442695
  %v648 = vpow.pop %v647
  %v649 = vmul.f32 %v559, 1.442695
  %v650 = vpow.pop %v649
  %v651 = vmul.f32 %v560, 1.442695
  %v652 = vpow.pop %v651
  %v653 = vmul.f32 %v561, 1.442695
  %v654 = vpow.pop %v653
  %v655 = vmul.f32 %v562, 1.442695
  %v656 = vpow.pop %v655
  %v657 = vmul.f32 %v563, 1.442695
  %v658 = vpow.pop %v657
  %v659 = vmul.f32 %v564, 1.442695
  %v660 = vpow.pop %v659
  %v661 = vmul.f32 %v565, 1.442695
  %v662 = vpow.pop %v661
  %v663 = vmul.f32 %v566, 1.442695
  %v664 = vpow.pop %v663
  %v665 = vmul.f32 %v567, 1.442695
  %v666 = vpow.pop %v665
  %v667 = vmul.f32 %v568, 1.442695
  %v668 = vpow.pop %v667
  %v669 = vmul.f32 %v569, 1.442695
  %v670 = vpow.pop %v669
  %v671 = vmul.f32 %v570, 1.442695
  %v672 = vpow.pop %v671
  %v673 = vmul.f32 %v571, 1.442695
  %v674 = vpow.pop %v673
  %v675 = vmul.f32 %v572, 1.442695
  %v676 = vpow.pop %v675
  %v677 = vmul.f32 %v573, 1.442695
  %v678 = vpow.pop %v677
  %v679 = vmul.f32 %v574, 1.442695
  %v680 = vpow.pop %v679
  %v681 = vmul.f32 %v575, 1.442695
  %v682 = vpow.pop %v681
  %v683 = vmul.f32 %v576, 1.442695
  %v684 = vpow.pop %v683
  %v685 = vmul.f32 %v577, 1.442695
  %v686 = vpow.pop %v685
  %v687 = vmul.f32 %v578, 1.442695
  %v688 = vpow.pop %v687
  %v689 = vmul.f32 %v579, 1.442695
  %v690 = vpow.pop %v689
  %v691 = vmul.f32 %v580, 1.442695
  %v692 = vpow.pop %v691
  %v693 = vmul.f32 %v581, 1.442695
  %v694 = vpow.pop %v693
  %v695 = vmul.f32 %v582, 1.442695
  %v696 = vpow.pop %v695
  %v697 = vmul.f32 %v583, 1.442695
  %v698 = vpow.pop %v697
  %v699 = vmul.f32 %v584, 1.442695
  %v700 = vpow.pop %v699
  %v701 = vmul.f32 %v585, 1.442695
  %v702 = vpow.pop %v701
  %v703 = vmul.f32 %v586, 1.442695
  %v704 = vpow.pop %v703
  %v705 = vmul.f32 %v587, 1.442695
  %v706 = vpow.pop %v705
  %v707 = vmul.f32 %v588, 1.442695
  %v708 = vpow.pop %v707
  %v709 = vmul.f32 %v589, 1.442695
  %v710 = vpow.pop %v709
  %v711 = vmul.f32 %v590, 1.442695
  %v712 = vpow.pop %v711
  %v713 = vmul.f32 %v591, 1.442695
  %v714 = vpow.pop %v713
  %v715 = vmul.f32 %v592, 1.442695
  %v716 = vpow.pop %v715
  %v717 = vmul.f32 %v593, 1.442695
  %v718 = vpow.pop %v717
  %v719 = vmul.f32 %v594, 1.442695
  %v720 = vpow.pop %v719
  %v721 = vmul.f32 %v595, 1.442695
  %v722 = vpow.pop %v721
  %v723 = vmul.f32 %v596, 1.442695
  %v724 = vpow.pop %v723
  %v725 = vadd.f32 %v598, 1.0
  %v726 = vadd.f32 %v600, 1.0
  %v727 = vadd.f32 %v602, 1.0
  %v728 = vadd.f32 %v604, 1.0
  %v729 = vadd.f32 %v606, 1.0
  %v730 = vadd.f32 %v608, 1.0
  %v731 = vadd.f32 %v610, 1.0
  %v732 = vadd.f32 %v612, 1.0
  %v733 = vadd.f32 %v614, 1.0
  %v734 = vadd.f32 %v616, 1.0
  %v735 = vadd.f32 %v618, 1.0
  %v736 = vadd.f32 %v620, 1.0
  %v737 = vadd.f32 %v622, 1.0
  %v738 = vadd.f32 %v624, 1.0
  %v739 = vadd.f32 %v626, 1.0
  %v740 = vadd.f32 %v628, 1.0
  %v741 = vadd.f32 %v630, 1.0
  %v742 = vadd.f32 %v632, 1.0
  %v743 = vadd.f32 %v634, 1.0
  %v744 = vadd.f32 %v636, 1.0
  %v745 = vadd.f32 %v638, 1.0
  %v746 = vadd.f32 %v640, 1.0
  %v747 = vadd.f32 %v642, 1.0
  %v748 = vadd.f32 %v644, 1.0
  %v749 = vadd.f32 %v646, 1.0
  %v750 = vadd.f32 %v648, 1.0
  %v751 = vadd.f32 %v650, 1.0
  %v752 = vadd.f32 %v652, 1.0
  %v753 = vadd.f32 %v654, 1.0
  %v754 = vadd.f32 %v656, 1.0
  %v755 = vadd.f32 %v658, 1.0
  %v756 = vadd.f32 %v660, 1.0
  %v757 = vadd.f32 %v662, 1.0
  %v758 = vadd.f32 %v664, 1.0
  %v759 = vadd.f32 %v666, 1.0
  %v760 = vadd.f32 %v668, 1.0
  %v761 = vadd.f32 %v670, 1.0
  %v762 = vadd.f32 %v672, 1.0
  %v763 = vadd.f32 %v674, 1.0
  %v764 = vadd.f32 %v676, 1.0
  %v765 = vadd.f32 %v678, 1.0
  %v766 = vadd.f32 %v680, 1.0
  %v767 = vadd.f32 %v682, 1.0
  %v768 = vadd.f32 %v684, 1.0
  %v769 = vadd.f32 %v686, 1.0
  %v770 = vadd.f32 %v688, 1.0
  %v771 = vadd.f32 %v690, 1.0
  %v772 = vadd.f32 %v692, 1.0
  %v773 = vadd.f32 %v694, 1.0
  %v774 = vadd.f32 %v696, 1.0
  %v775 = vadd.f32 %v698, 1.0
  %v776 = vadd.f32 %v700, 1.0
  %v777 = vadd.f32 %v702, 1.0
  %v778 = vadd.f32 %v704, 1.0
  %v779 = vadd.f32 %v706, 1.0
  %v780 = vadd.f32 %v708, 1.0
  %v781 = vadd.f32 %v710, 1.0
  %v782 = vadd.f32 %v712, 1.0
  %v783 = vadd.f32 %v714, 1.0
  %v784 = vadd.f32 %v716, 1.0
  %v785 = vadd.f32 %v718, 1.0
  %v786 = vadd.f32 %v720, 1.0
  %v787 = vadd.f32 %v722, 1.0
  %v788 = vadd.f32 %v724, 1.0
  %v789 = vrcp.pop %v725
  %v790 = vmul.f32 %v725, %v789
  %v791 = vsub.f32 1.0, %v790
  %v792 = vmul.f32 %v789, %v791
  %v793 = vadd.f32 %v789, %v792
  %vm794 = vweird.f32 %v725
  %vm795 = vweird.f32 %v789
  %vm796 = vmor %vm794, %vm795
  %v797 = vsel %vm796, %v789, %v793
  %v798 = vand.u32 2147483647, %v725
  %vm799 = vcmp.eq.f32.partialorder %v798, 8.507059e+37
  %v800 = vand.u32 %v725, 2147483648
  %v801 = vor.u32 1.1754944e-38, %v800
  %v802 = vsel %vm799, %v801, %v797
  %v803 = vmul.f32 1.0, %v802
  %v804 = vrcp.pop %v726
  %v805 = vmul.f32 %v726, %v804
  %v806 = vsub.f32 1.0, %v805
  %v807 = vmul.f32 %v804, %v806
  %v808 = vadd.f32 %v804, %v807
  %vm809 = vweird.f32 %v726
  %vm810 = vweird.f32 %v804
  %vm811 = vmor %vm809, %vm810
  %v812 = vsel %vm811, %v804, %v808
  %v813 = vand.u32 2147483647, %v726
  %vm814 = vcmp.eq.f32.partialorder %v813, 8.507059e+37
  %v815 = vand.u32 %v726, 2147483648
  %v816 = vor.u32 1.1754944e-38, %v815
  %v817 = vsel %vm814, %v816, %v812
  %v818 = vmul.f32 1.0, %v817
  %v819 = vrcp.pop %v727
  %v820 = vmul.f32 %v727, %v819
  %v821 = vsub.f32 1.0, %v820
  %v822 = vmul.f32 %v819, %v821
  %v823 = vadd.f32 %v819, %v822
  %vm824 = vweird.f32 %v727
  %vm825 = vweird.f32 %v819
  %vm826 = vmor %vm824, %vm825
  %v827 = vsel %vm826, %v819, %v823
  %v828 = vand.u32 2147483647, %v727
  %vm829 = vcmp.eq.f32.partialorder %v828, 8.507059e+37
  %v830 = vand.u32 %v727, 2147483648
  %v831 = vor.u32 1.1754944e-38, %v830
  %v832 = vsel %vm829, %v831, %v827
  %v833 = vmul.f32 1.0, %v832
  %v834 = vrcp.pop %v728
  %v835 = vmul.f32 %v728, %v834
  %v836 = vsub.f32 1.0, %v835
  %v837 = vmul.f32 %v834, %v836
  %v838 = vadd.f32 %v834, %v837
  %vm839 = vweird.f32 %v728
  %vm840 = vweird.f32 %v834
  %vm841 = vmor %vm839, %vm840
  %v842 = vsel %vm841, %v834, %v838
  %v843 = vand.u32 2147483647, %v728
  %vm844 = vcmp.eq.f32.partialorder %v843, 8.507059e+37
  %v845 = vand.u32 %v728, 2147483648
  %v846 = vor.u32 1.1754944e-38, %v845
  %v847 = vsel %vm844, %v846, %v842
  %v848 = vmul.f32 1.0, %v847
  %v849 = vrcp.pop %v729
  %v850 = vmul.f32 %v729, %v849
  %v851 = vsub.f32 1.0, %v850
  %v852 = vmul.f32 %v849, %v851
  %v853 = vadd.f32 %v849, %v852
  %vm854 = vweird.f32 %v729
  %vm855 = vweird.f32 %v849
  %vm856 = vmor %vm854, %vm855
  %v857 = vsel %vm856, %v849, %v853
  %v858 = vand.u32 2147483647, %v729
  %vm859 = vcmp.eq.f32.partialorder %v858, 8.507059e+37
  %v860 = vand.u32 %v729, 2147483648
  %v861 = vor.u32 1.1754944e-38, %v860
  %v862 = vsel %vm859, %v861, %v857
  %v863 = vmul.f32 1.0, %v862
  %v864 = vrcp.pop %v730
  %v865 = vmul.f32 %v730, %v864
  %v866 = vsub.f32 1.0, %v865
  %v867 = vmul.f32 %v864, %v866
  %v868 = vadd.f32 %v864, %v867
  %vm869 = vweird.f32 %v730
  %vm870 = vweird.f32 %v864
  %vm871 = vmor %vm869, %vm870
  %v872 = vsel %vm871, %v864, %v868
  %v873 = vand.u32 2147483647, %v730
  %vm874 = vcmp.eq.f32.partialorder %v873, 8.507059e+37
  %v875 = vand.u32 %v730, 2147483648
  %v876 = vor.u32 1.1754944e-38, %v875
  %v877 = vsel %vm874, %v876, %v872
  %v878 = vmul.f32 1.0, %v877
  %v879 = vrcp.pop %v731
  %v880 = vmul.f32 %v731, %v879
  %v881 = vsub.f32 1.0, %v880
  %v882 = vmul.f32 %v879, %v881
  %v883 = vadd.f32 %v879, %v882
  %vm884 = vweird.f32 %v731
  %vm885 = vweird.f32 %v879
  %vm886 = vmor %vm884, %vm885
  %v887 = vsel %vm886, %v879, %v883
  %v888 = vand.u32 2147483647, %v731
  %vm889 = vcmp.eq.f32.partialorder %v888, 8.507059e+37
  %v890 = vand.u32 %v731, 2147483648
  %v891 = vor.u32 1.1754944e-38, %v890
  %v892 = vsel %vm889, %v891, %v887
  %v893 = vmul.f32 1.0, %v892
  %v894 = vrcp.pop %v732
  %v895 = vmul.f32 %v732, %v894
  %v896 = vsub.f32 1.0, %v895
  %v897 = vmul.f32 %v894, %v896
  %v898 = vadd.f32 %v894, %v897
  %vm899 = vweird.f32 %v732
  %vm900 = vweird.f32 %v894
  %vm901 = vmor %vm899, %vm900
  %v902 = vsel %vm901, %v894, %v898
  %v903 = vand.u32 2147483647, %v732
  %vm904 = vcmp.eq.f32.partialorder %v903, 8.507059e+37
  %v905 = vand.u32 %v732, 2147483648
  %v906 = vor.u32 1.1754944e-38, %v905
  %v907 = vsel %vm904, %v906, %v902
  %v908 = vmul.f32 1.0, %v907
  %v909 = vrcp.pop %v733
  %v910 = vmul.f32 %v733, %v909
  %v911 = vsub.f32 1.0, %v910
  %v912 = vmul.f32 %v909, %v911
  %v913 = vadd.f32 %v909, %v912
  %vm914 = vweird.f32 %v733
  %vm915 = vweird.f32 %v909
  %vm916 = vmor %vm914, %vm915
  %v917 = vsel %vm916, %v909, %v913
  %v918 = vand.u32 2147483647, %v733
  %vm919 = vcmp.eq.f32.partialorder %v918, 8.507059e+37
  %v920 = vand.u32 %v733, 2147483648
  %v921 = vor.u32 1.1754944e-38, %v920
  %v922 = vsel %vm919, %v921, %v917
  %v923 = vmul.f32 1.0, %v922
  %v924 = vrcp.pop %v734
  %v925 = vmul.f32 %v734, %v924
  %v926 = vsub.f32 1.0, %v925
  %v927 = vmul.f32 %v924, %v926
  %v928 = vadd.f32 %v924, %v927
  %vm929 = vweird.f32 %v734
  %vm930 = vweird.f32 %v924
  %vm931 = vmor %vm929, %vm930
  %v932 = vsel %vm931, %v924, %v928
  %v933 = vand.u32 2147483647, %v734
  %vm934 = vcmp.eq.f32.partialorder %v933, 8.507059e+37
  %v935 = vand.u32 %v734, 2147483648
  %v936 = vor.u32 1.1754944e-38, %v935
  %v937 = vsel %vm934, %v936, %v932
  %v938 = vmul.f32 1.0, %v937
  %v939 = vrcp.pop %v735
  %v940 = vmul.f32 %v735, %v939
  %v941 = vsub.f32 1.0, %v940
  %v942 = vmul.f32 %v939, %v941
  %v943 = vadd.f32 %v939, %v942
  %vm944 = vweird.f32 %v735
  %vm945 = vweird.f32 %v939
  %vm946 = vmor %vm944, %vm945
  %v947 = vsel %vm946, %v939, %v943
  %v948 = vand.u32 2147483647, %v735
  %vm949 = vcmp.eq.f32.partialorder %v948, 8.507059e+37
  %v950 = vand.u32 %v735, 2147483648
  %v951 = vor.u32 1.1754944e-38, %v950
  %v952 = vsel %vm949, %v951, %v947
  %v953 = vmul.f32 1.0, %v952
  %v954 = vrcp.pop %v736
  %v955 = vmul.f32 %v736, %v954
  %v956 = vsub.f32 1.0, %v955
  %v957 = vmul.f32 %v954, %v956
  %v958 = vadd.f32 %v954, %v957
  %vm959 = vweird.f32 %v736
  %vm960 = vweird.f32 %v954
  %vm961 = vmor %vm959, %vm960
  %v962 = vsel %vm961, %v954, %v958
  %v963 = vand.u32 2147483647, %v736
  %vm964 = vcmp.eq.f32.partialorder %v963, 8.507059e+37
  %v965 = vand.u32 %v736, 2147483648
  %v966 = vor.u32 1.1754944e-38, %v965
  %v967 = vsel %vm964, %v966, %v962
  %v968 = vmul.f32 1.0, %v967
  %v969 = vrcp.pop %v737
  %v970 = vmul.f32 %v737, %v969
  %v971 = vsub.f32 1.0, %v970
  %v972 = vmul.f32 %v969, %v971
  %v973 = vadd.f32 %v969, %v972
  %vm974 = vweird.f32 %v737
  %vm975 = vweird.f32 %v969
  %vm976 = vmor %vm974, %vm975
  %v977 = vsel %vm976, %v969, %v973
  %v978 = vand.u32 2147483647, %v737
  %vm979 = vcmp.eq.f32.partialorder %v978, 8.507059e+37
  %v980 = vand.u32 %v737, 2147483648
  %v981 = vor.u32 1.1754944e-38, %v980
  %v982 = vsel %vm979, %v981, %v977
  %v983 = vmul.f32 1.0, %v982
  %v984 = vrcp.pop %v738
  %v985 = vmul.f32 %v738, %v984
  %v986 = vsub.f32 1.0, %v985
  %v987 = vmul.f32 %v984, %v986
  %v988 = vadd.f32 %v984, %v987
  %vm989 = vweird.f32 %v738
  %vm990 = vweird.f32 %v984
  %vm991 = vmor %vm989, %vm990
  %v992 = vsel %vm991, %v984, %v988
  %v993 = vand.u32 2147483647, %v738
  %vm994 = vcmp.eq.f32.partialorder %v993, 8.507059e+37
  %v995 = vand.u32 %v738, 2147483648
  %v996 = vor.u32 1.1754944e-38, %v995
  %v997 = vsel %vm994, %v996, %v992
  %v998 = vmul.f32 1.0, %v997
  %v999 = vrcp.pop %v739
  %v1000 = vmul.f32 %v739, %v999
  %v1001 = vsub.f32 1.0, %v1000
  %v1002 = vmul.f32 %v999, %v1001
  %v1003 = vadd.f32 %v999, %v1002
  %vm1004 = vweird.f32 %v739
  %vm1005 = vweird.f32 %v999
  %vm1006 = vmor %vm1004, %vm1005
  %v1007 = vsel %vm1006, %v999, %v1003
  %v1008 = vand.u32 2147483647, %v739
  %vm1009 = vcmp.eq.f32.partialorder %v1008, 8.507059e+37
  %v1010 = vand.u32 %v739, 2147483648
  %v1011 = vor.u32 1.1754944e-38, %v1010
  %v1012 = vsel %vm1009, %v1011, %v1007
  %v1013 = vmul.f32 1.0, %v1012
  %v1014 = vrcp.pop %v740
  %v1015 = vmul.f32 %v740, %v1014
  %v1016 = vsub.f32 1.0, %v1015
  %v1017 = vmul.f32 %v1014, %v1016
  %v1018 = vadd.f32 %v1014, %v1017
  %vm1019 = vweird.f32 %v740
  %vm1020 = vweird.f32 %v1014
  %vm1021 = vmor %vm1019, %vm1020
  %v1022 = vsel %vm1021, %v1014, %v1018
  %v1023 = vand.u32 2147483647, %v740
  %vm1024 = vcmp.eq.f32.partialorder %v1023, 8.507059e+37
  %v1025 = vand.u32 %v740, 2147483648
  %v1026 = vor.u32 1.1754944e-38, %v1025
  %v1027 = vsel %vm1024, %v1026, %v1022
  %v1028 = vmul.f32 1.0, %v1027
  %v1029 = vrcp.pop %v741
  %v1030 = vmul.f32 %v741, %v1029
  %v1031 = vsub.f32 1.0, %v1030
  %v1032 = vmul.f32 %v1029, %v1031
  %v1033 = vadd.f32 %v1029, %v1032
  %vm1034 = vweird.f32 %v741
  %vm1035 = vweird.f32 %v1029
  %vm1036 = vmor %vm1034, %vm1035
  %v1037 = vsel %vm1036, %v1029, %v1033
  %v1038 = vand.u32 2147483647, %v741
  %vm1039 = vcmp.eq.f32.partialorder %v1038, 8.507059e+37
  %v1040 = vand.u32 %v741, 2147483648
  %v1041 = vor.u32 1.1754944e-38, %v1040
  %v1042 = vsel %vm1039, %v1041, %v1037
  %v1043 = vmul.f32 1.0, %v1042
  %v1044 = vrcp.pop %v742
  %v1045 = vmul.f32 %v742, %v1044
  %v1046 = vsub.f32 1.0, %v1045
  %v1047 = vmul.f32 %v1044, %v1046
  %v1048 = vadd.f32 %v1044, %v1047
  %vm1049 = vweird.f32 %v742
  %vm1050 = vweird.f32 %v1044
  %vm1051 = vmor %vm1049, %vm1050
  %v1052 = vsel %vm1051, %v1044, %v1048
  %v1053 = vand.u32 2147483647, %v742
  %vm1054 = vcmp.eq.f32.partialorder %v1053, 8.507059e+37
  %v1055 = vand.u32 %v742, 2147483648
  %v1056 = vor.u32 1.1754944e-38, %v1055
  %v1057 = vsel %vm1054, %v1056, %v1052
  %v1058 = vmul.f32 1.0, %v1057
  %v1059 = vrcp.pop %v743
  %v1060 = vmul.f32 %v743, %v1059
  %v1061 = vsub.f32 1.0, %v1060
  %v1062 = vmul.f32 %v1059, %v1061
  %v1063 = vadd.f32 %v1059, %v1062
  %vm1064 = vweird.f32 %v743
  %vm1065 = vweird.f32 %v1059
  %vm1066 = vmor %vm1064, %vm1065
  %v1067 = vsel %vm1066, %v1059, %v1063
  %v1068 = vand.u32 2147483647, %v743
  %vm1069 = vcmp.eq.f32.partialorder %v1068, 8.507059e+37
  %v1070 = vand.u32 %v743, 2147483648
  %v1071 = vor.u32 1.1754944e-38, %v1070
  %v1072 = vsel %vm1069, %v1071, %v1067
  %v1073 = vmul.f32 1.0, %v1072
  %v1074 = vrcp.pop %v744
  %v1075 = vmul.f32 %v744, %v1074
  %v1076 = vsub.f32 1.0, %v1075
  %v1077 = vmul.f32 %v1074, %v1076
  %v1078 = vadd.f32 %v1074, %v1077
  %vm1079 = vweird.f32 %v744
  %vm1080 = vweird.f32 %v1074
  %vm1081 = vmor %vm1079, %vm1080
  %v1082 = vsel %vm1081, %v1074, %v1078
  %v1083 = vand.u32 2147483647, %v744
  %vm1084 = vcmp.eq.f32.partialorder %v1083, 8.507059e+37
  %v1085 = vand.u32 %v744, 2147483648
  %v1086 = vor.u32 1.1754944e-38, %v1085
  %v1087 = vsel %vm1084, %v1086, %v1082
  %v1088 = vmul.f32 1.0, %v1087
  %v1089 = vrcp.pop %v745
  %v1090 = vmul.f32 %v745, %v1089
  %v1091 = vsub.f32 1.0, %v1090
  %v1092 = vmul.f32 %v1089, %v1091
  %v1093 = vadd.f32 %v1089, %v1092
  %vm1094 = vweird.f32 %v745
  %vm1095 = vweird.f32 %v1089
  %vm1096 = vmor %vm1094, %vm1095
  %v1097 = vsel %vm1096, %v1089, %v1093
  %v1098 = vand.u32 2147483647, %v745
  %vm1099 = vcmp.eq.f32.partialorder %v1098, 8.507059e+37
  %v1100 = vand.u32 %v745, 2147483648
  %v1101 = vor.u32 1.1754944e-38, %v1100
  %v1102 = vsel %vm1099, %v1101, %v1097
  %v1103 = vmul.f32 1.0, %v1102
  %v1104 = vrcp.pop %v746
  %v1105 = vmul.f32 %v746, %v1104
  %v1106 = vsub.f32 1.0, %v1105
  %v1107 = vmul.f32 %v1104, %v1106
  %v1108 = vadd.f32 %v1104, %v1107
  %vm1109 = vweird.f32 %v746
  %vm1110 = vweird.f32 %v1104
  %vm1111 = vmor %vm1109, %vm1110
  %v1112 = vsel %vm1111, %v1104, %v1108
  %v1113 = vand.u32 2147483647, %v746
  %vm1114 = vcmp.eq.f32.partialorder %v1113, 8.507059e+37
  %v1115 = vand.u32 %v746, 2147483648
  %v1116 = vor.u32 1.1754944e-38, %v1115
  %v1117 = vsel %vm1114, %v1116, %v1112
  %v1118 = vmul.f32 1.0, %v1117
  %v1119 = vrcp.pop %v747
  %v1120 = vmul.f32 %v747, %v1119
  %v1121 = vsub.f32 1.0, %v1120
  %v1122 = vmul.f32 %v1119, %v1121
  %v1123 = vadd.f32 %v1119, %v1122
  %vm1124 = vweird.f32 %v747
  %vm1125 = vweird.f32 %v1119
  %vm1126 = vmor %vm1124, %vm1125
  %v1127 = vsel %vm1126, %v1119, %v1123
  %v1128 = vand.u32 2147483647, %v747
  %vm1129 = vcmp.eq.f32.partialorder %v1128, 8.507059e+37
  %v1130 = vand.u32 %v747, 2147483648
  %v1131 = vor.u32 1.1754944e-38, %v1130
  %v1132 = vsel %vm1129, %v1131, %v1127
  %v1133 = vmul.f32 1.0, %v1132
  %v1134 = vrcp.pop %v748
  %v1135 = vmul.f32 %v748, %v1134
  %v1136 = vsub.f32 1.0, %v1135
  %v1137 = vmul.f32 %v1134, %v1136
  %v1138 = vadd.f32 %v1134, %v1137
  %vm1139 = vweird.f32 %v748
  %vm1140 = vweird.f32 %v1134
  %vm1141 = vmor %vm1139, %vm1140
  %v1142 = vsel %vm1141, %v1134, %v1138
  %v1143 = vand.u32 2147483647, %v748
  %vm1144 = vcmp.eq.f32.partialorder %v1143, 8.507059e+37
  %v1145 = vand.u32 %v748, 2147483648
  %v1146 = vor.u32 1.1754944e-38, %v1145
  %v1147 = vsel %vm1144, %v1146, %v1142
  %v1148 = vmul.f32 1.0, %v1147
  %v1149 = vrcp.pop %v749
  %v1150 = vmul.f32 %v749, %v1149
  %v1151 = vsub.f32 1.0, %v1150
  %v1152 = vmul.f32 %v1149, %v1151
  %v1153 = vadd.f32 %v1149, %v1152
  %vm1154 = vweird.f32 %v749
  %vm1155 = vweird.f32 %v1149
  %vm1156 = vmor %vm1154, %vm1155
  %v1157 = vsel %vm1156, %v1149, %v1153
  %v1158 = vand.u32 2147483647, %v749
  %vm1159 = vcmp.eq.f32.partialorder %v1158, 8.507059e+37
  %v1160 = vand.u32 %v749, 2147483648
  %v1161 = vor.u32 1.1754944e-38, %v1160
  %v1162 = vsel %vm1159, %v1161, %v1157
  %v1163 = vmul.f32 1.0, %v1162
  %v1164 = vrcp.pop %v750
  %v1165 = vmul.f32 %v750, %v1164
  %v1166 = vsub.f32 1.0, %v1165
  %v1167 = vmul.f32 %v1164, %v1166
  %v1168 = vadd.f32 %v1164, %v1167
  %vm1169 = vweird.f32 %v750
  %vm1170 = vweird.f32 %v1164
  %vm1171 = vmor %vm1169, %vm1170
  %v1172 = vsel %vm1171, %v1164, %v1168
  %v1173 = vand.u32 2147483647, %v750
  %vm1174 = vcmp.eq.f32.partialorder %v1173, 8.507059e+37
  %v1175 = vand.u32 %v750, 2147483648
  %v1176 = vor.u32 1.1754944e-38, %v1175
  %v1177 = vsel %vm1174, %v1176, %v1172
  %v1178 = vmul.f32 1.0, %v1177
  %v1179 = vrcp.pop %v751
  %v1180 = vmul.f32 %v751, %v1179
  %v1181 = vsub.f32 1.0, %v1180
  %v1182 = vmul.f32 %v1179, %v1181
  %v1183 = vadd.f32 %v1179, %v1182
  %vm1184 = vweird.f32 %v751
  %vm1185 = vweird.f32 %v1179
  %vm1186 = vmor %vm1184, %vm1185
  %v1187 = vsel %vm1186, %v1179, %v1183
  %v1188 = vand.u32 2147483647, %v751
  %vm1189 = vcmp.eq.f32.partialorder %v1188, 8.507059e+37
  %v1190 = vand.u32 %v751, 2147483648
  %v1191 = vor.u32 1.1754944e-38, %v1190
  %v1192 = vsel %vm1189, %v1191, %v1187
  %v1193 = vmul.f32 1.0, %v1192
  %v1194 = vrcp.pop %v752
  %v1195 = vmul.f32 %v752, %v1194
  %v1196 = vsub.f32 1.0, %v1195
  %v1197 = vmul.f32 %v1194, %v1196
  %v1198 = vadd.f32 %v1194, %v1197
  %vm1199 = vweird.f32 %v752
  %vm1200 = vweird.f32 %v1194
  %vm1201 = vmor %vm1199, %vm1200
  %v1202 = vsel %vm1201, %v1194, %v1198
  %v1203 = vand.u32 2147483647, %v752
  %vm1204 = vcmp.eq.f32.partialorder %v1203, 8.507059e+37
  %v1205 = vand.u32 %v752, 2147483648
  %v1206 = vor.u32 1.1754944e-38, %v1205
  %v1207 = vsel %vm1204, %v1206, %v1202
  %v1208 = vmul.f32 1.0, %v1207
  %v1209 = vrcp.pop %v753
  %v1210 = vmul.f32 %v753, %v1209
  %v1211 = vsub.f32 1.0, %v1210
  %v1212 = vmul.f32 %v1209, %v1211
  %v1213 = vadd.f32 %v1209, %v1212
  %vm1214 = vweird.f32 %v753
  %vm1215 = vweird.f32 %v1209
  %vm1216 = vmor %vm1214, %vm1215
  %v1217 = vsel %vm1216, %v1209, %v1213
  %v1218 = vand.u32 2147483647, %v753
  %vm1219 = vcmp.eq.f32.partialorder %v1218, 8.507059e+37
  %v1220 = vand.u32 %v753, 2147483648
  %v1221 = vor.u32 1.1754944e-38, %v1220
  %v1222 = vsel %vm1219, %v1221, %v1217
  %v1223 = vmul.f32 1.0, %v1222
  %v1224 = vrcp.pop %v754
  %v1225 = vmul.f32 %v754, %v1224
  %v1226 = vsub.f32 1.0, %v1225
  %v1227 = vmul.f32 %v1224, %v1226
  %v1228 = vadd.f32 %v1224, %v1227
  %vm1229 = vweird.f32 %v754
  %vm1230 = vweird.f32 %v1224
  %vm1231 = vmor %vm1229, %vm1230
  %v1232 = vsel %vm1231, %v1224, %v1228
  %v1233 = vand.u32 2147483647, %v754
  %vm1234 = vcmp.eq.f32.partialorder %v1233, 8.507059e+37
  %v1235 = vand.u32 %v754, 2147483648
  %v1236 = vor.u32 1.1754944e-38, %v1235
  %v1237 = vsel %vm1234, %v1236, %v1232
  %v1238 = vmul.f32 1.0, %v1237
  %v1239 = vrcp.pop %v755
  %v1240 = vmul.f32 %v755, %v1239
  %v1241 = vsub.f32 1.0, %v1240
  %v1242 = vmul.f32 %v1239, %v1241
  %v1243 = vadd.f32 %v1239, %v1242
  %vm1244 = vweird.f32 %v755
  %vm1245 = vweird.f32 %v1239
  %vm1246 = vmor %vm1244, %vm1245
  %v1247 = vsel %vm1246, %v1239, %v1243
  %v1248 = vand.u32 2147483647, %v755
  %vm1249 = vcmp.eq.f32.partialorder %v1248, 8.507059e+37
  %v1250 = vand.u32 %v755, 2147483648
  %v1251 = vor.u32 1.1754944e-38, %v1250
  %v1252 = vsel %vm1249, %v1251, %v1247
  %v1253 = vmul.f32 1.0, %v1252
  %v1254 = vrcp.pop %v756
  %v1255 = vmul.f32 %v756, %v1254
  %v1256 = vsub.f32 1.0, %v1255
  %v1257 = vmul.f32 %v1254, %v1256
  %v1258 = vadd.f32 %v1254, %v1257
  %vm1259 = vweird.f32 %v756
  %vm1260 = vweird.f32 %v1254
  %vm1261 = vmor %vm1259, %vm1260
  %v1262 = vsel %vm1261, %v1254, %v1258
  %v1263 = vand.u32 2147483647, %v756
  %vm1264 = vcmp.eq.f32.partialorder %v1263, 8.507059e+37
  %v1265 = vand.u32 %v756, 2147483648
  %v1266 = vor.u32 1.1754944e-38, %v1265
  %v1267 = vsel %vm1264, %v1266, %v1262
  %v1268 = vmul.f32 1.0, %v1267
  %v1269 = vrcp.pop %v757
  %v1270 = vmul.f32 %v757, %v1269
  %v1271 = vsub.f32 1.0, %v1270
  %v1272 = vmul.f32 %v1269, %v1271
  %v1273 = vadd.f32 %v1269, %v1272
  %vm1274 = vweird.f32 %v757
  %vm1275 = vweird.f32 %v1269
  %vm1276 = vmor %vm1274, %vm1275
  %v1277 = vsel %vm1276, %v1269, %v1273
  %v1278 = vand.u32 2147483647, %v757
  %vm1279 = vcmp.eq.f32.partialorder %v1278, 8.507059e+37
  %v1280 = vand.u32 %v757, 2147483648
  %v1281 = vor.u32 1.1754944e-38, %v1280
  %v1282 = vsel %vm1279, %v1281, %v1277
  %v1283 = vmul.f32 1.0, %v1282
  %v1284 = vrcp.pop %v758
  %v1285 = vmul.f32 %v758, %v1284
  %v1286 = vsub.f32 1.0, %v1285
  %v1287 = vmul.f32 %v1284, %v1286
  %v1288 = vadd.f32 %v1284, %v1287
  %vm1289 = vweird.f32 %v758
  %vm1290 = vweird.f32 %v1284
  %vm1291 = vmor %vm1289, %vm1290
  %v1292 = vsel %vm1291, %v1284, %v1288
  %v1293 = vand.u32 2147483647, %v758
  %vm1294 = vcmp.eq.f32.partialorder %v1293, 8.507059e+37
  %v1295 = vand.u32 %v758, 2147483648
  %v1296 = vor.u32 1.1754944e-38, %v1295
  %v1297 = vsel %vm1294, %v1296, %v1292
  %v1298 = vmul.f32 1.0, %v1297
  %v1299 = vrcp.pop %v759
  %v1300 = vmul.f32 %v759, %v1299
  %v1301 = vsub.f32 1.0, %v1300
  %v1302 = vmul.f32 %v1299, %v1301
  %v1303 = vadd.f32 %v1299, %v1302
  %vm1304 = vweird.f32 %v759
  %vm1305 = vweird.f32 %v1299
  %vm1306 = vmor %vm1304, %vm1305
  %v1307 = vsel %vm1306, %v1299, %v1303
  %v1308 = vand.u32 2147483647, %v759
  %vm1309 = vcmp.eq.f32.partialorder %v1308, 8.507059e+37
  %v1310 = vand.u32 %v759, 2147483648
  %v1311 = vor.u32 1.1754944e-38, %v1310
  %v1312 = vsel %vm1309, %v1311, %v1307
  %v1313 = vmul.f32 1.0, %v1312
  %v1314 = vrcp.pop %v760
  %v1315 = vmul.f32 %v760, %v1314
  %v1316 = vsub.f32 1.0, %v1315
  %v1317 = vmul.f32 %v1314, %v1316
  %v1318 = vadd.f32 %v1314, %v1317
  %vm1319 = vweird.f32 %v760
  %vm1320 = vweird.f32 %v1314
  %vm1321 = vmor %vm1319, %vm1320
  %v1322 = vsel %vm1321, %v1314, %v1318
  %v1323 = vand.u32 2147483647, %v760
  %vm1324 = vcmp.eq.f32.partialorder %v1323, 8.507059e+37
  %v1325 = vand.u32 %v760, 2147483648
  %v1326 = vor.u32 1.1754944e-38, %v1325
  %v1327 = vsel %vm1324, %v1326, %v1322
  %v1328 = vmul.f32 1.0, %v1327
  %v1329 = vrcp.pop %v761
  %v1330 = vmul.f32 %v761, %v1329
  %v1331 = vsub.f32 1.0, %v1330
  %v1332 = vmul.f32 %v1329, %v1331
  %v1333 = vadd.f32 %v1329, %v1332
  %vm1334 = vweird.f32 %v761
  %vm1335 = vweird.f32 %v1329
  %vm1336 = vmor %vm1334, %vm1335
  %v1337 = vsel %vm1336, %v1329, %v1333
  %v1338 = vand.u32 2147483647, %v761
  %vm1339 = vcmp.eq.f32.partialorder %v1338, 8.507059e+37
  %v1340 = vand.u32 %v761, 2147483648
  %v1341 = vor.u32 1.1754944e-38, %v1340
  %v1342 = vsel %vm1339, %v1341, %v1337
  %v1343 = vmul.f32 1.0, %v1342
  %v1344 = vrcp.pop %v762
  %v1345 = vmul.f32 %v762, %v1344
  %v1346 = vsub.f32 1.0, %v1345
  %v1347 = vmul.f32 %v1344, %v1346
  %v1348 = vadd.f32 %v1344, %v1347
  %vm1349 = vweird.f32 %v762
  %vm1350 = vweird.f32 %v1344
  %vm1351 = vmor %vm1349, %vm1350
  %v1352 = vsel %vm1351, %v1344, %v1348
  %v1353 = vand.u32 2147483647, %v762
  %vm1354 = vcmp.eq.f32.partialorder %v1353, 8.507059e+37
  %v1355 = vand.u32 %v762, 2147483648
  %v1356 = vor.u32 1.1754944e-38, %v1355
  %v1357 = vsel %vm1354, %v1356, %v1352
  %v1358 = vmul.f32 1.0, %v1357
  %v1359 = vrcp.pop %v763
  %v1360 = vmul.f32 %v763, %v1359
  %v1361 = vsub.f32 1.0, %v1360
  %v1362 = vmul.f32 %v1359, %v1361
  %v1363 = vadd.f32 %v1359, %v1362
  %vm1364 = vweird.f32 %v763
  %vm1365 = vweird.f32 %v1359
  %vm1366 = vmor %vm1364, %vm1365
  %v1367 = vsel %vm1366, %v1359, %v1363
  %v1368 = vand.u32 2147483647, %v763
  %vm1369 = vcmp.eq.f32.partialorder %v1368, 8.507059e+37
  %v1370 = vand.u32 %v763, 2147483648
  %v1371 = vor.u32 1.1754944e-38, %v1370
  %v1372 = vsel %vm1369, %v1371, %v1367
  %v1373 = vmul.f32 1.0, %v1372
  %v1374 = vrcp.pop %v764
  %v1375 = vmul.f32 %v764, %v1374
  %v1376 = vsub.f32 1.0, %v1375
  %v1377 = vmul.f32 %v1374, %v1376
  %v1378 = vadd.f32 %v1374, %v1377
  %vm1379 = vweird.f32 %v764
  %vm1380 = vweird.f32 %v1374
  %vm1381 = vmor %vm1379, %vm1380
  %v1382 = vsel %vm1381, %v1374, %v1378
  %v1383 = vand.u32 2147483647, %v764
  %vm1384 = vcmp.eq.f32.partialorder %v1383, 8.507059e+37
  %v1385 = vand.u32 %v764, 2147483648
  %v1386 = vor.u32 1.1754944e-38, %v1385
  %v1387 = vsel %vm1384, %v1386, %v1382
  %v1388 = vmul.f32 1.0, %v1387
  %v1389 = vrcp.pop %v765
  %v1390 = vmul.f32 %v765, %v1389
  %v1391 = vsub.f32 1.0, %v1390
  %v1392 = vmul.f32 %v1389, %v1391
  %v1393 = vadd.f32 %v1389, %v1392
  %vm1394 = vweird.f32 %v765
  %vm1395 = vweird.f32 %v1389
  %vm1396 = vmor %vm1394, %vm1395
  %v1397 = vsel %vm1396, %v1389, %v1393
  %v1398 = vand.u32 2147483647, %v765
  %vm1399 = vcmp.eq.f32.partialorder %v1398, 8.507059e+37
  %v1400 = vand.u32 %v765, 2147483648
  %v1401 = vor.u32 1.1754944e-38, %v1400
  %v1402 = vsel %vm1399, %v1401, %v1397
  %v1403 = vmul.f32 1.0, %v1402
  %v1404 = vrcp.pop %v766
  %v1405 = vmul.f32 %v766, %v1404
  %v1406 = vsub.f32 1.0, %v1405
  %v1407 = vmul.f32 %v1404, %v1406
  %v1408 = vadd.f32 %v1404, %v1407
  %vm1409 = vweird.f32 %v766
  %vm1410 = vweird.f32 %v1404
  %vm1411 = vmor %vm1409, %vm1410
  %v1412 = vsel %vm1411, %v1404, %v1408
  %v1413 = vand.u32 2147483647, %v766
  %vm1414 = vcmp.eq.f32.partialorder %v1413, 8.507059e+37
  %v1415 = vand.u32 %v766, 2147483648
  %v1416 = vor.u32 1.1754944e-38, %v1415
  %v1417 = vsel %vm1414, %v1416, %v1412
  %v1418 = vmul.f32 1.0, %v1417
  %v1419 = vrcp.pop %v767
  %v1420 = vmul.f32 %v767, %v1419
  %v1421 = vsub.f32 1.0, %v1420
  %v1422 = vmul.f32 %v1419, %v1421
  %v1423 = vadd.f32 %v1419, %v1422
  %vm1424 = vweird.f32 %v767
  %vm1425 = vweird.f32 %v1419
  %vm1426 = vmor %vm1424, %vm1425
  %v1427 = vsel %vm1426, %v1419, %v1423
  %v1428 = vand.u32 2147483647, %v767
  %vm1429 = vcmp.eq.f32.partialorder %v1428, 8.507059e+37
  %v1430 = vand.u32 %v767, 2147483648
  %v1431 = vor.u32 1.1754944e-38, %v1430
  %v1432 = vsel %vm1429, %v1431, %v1427
  %v1433 = vmul.f32 1.0, %v1432
  %v1434 = vrcp.pop %v768
  %v1435 = vmul.f32 %v768, %v1434
  %v1436 = vsub.f32 1.0, %v1435
  %v1437 = vmul.f32 %v1434, %v1436
  %v1438 = vadd.f32 %v1434, %v1437
  %vm1439 = vweird.f32 %v768
  %vm1440 = vweird.f32 %v1434
  %vm1441 = vmor %vm1439, %vm1440
  %v1442 = vsel %vm1441, %v1434, %v1438
  %v1443 = vand.u32 2147483647, %v768
  %vm1444 = vcmp.eq.f32.partialorder %v1443, 8.507059e+37
  %v1445 = vand.u32 %v768, 2147483648
  %v1446 = vor.u32 1.1754944e-38, %v1445
  %v1447 = vsel %vm1444, %v1446, %v1442
  %v1448 = vmul.f32 1.0, %v1447
  %v1449 = vrcp.pop %v769
  %v1450 = vmul.f32 %v769, %v1449
  %v1451 = vsub.f32 1.0, %v1450
  %v1452 = vmul.f32 %v1449, %v1451
  %v1453 = vadd.f32 %v1449, %v1452
  %vm1454 = vweird.f32 %v769
  %vm1455 = vweird.f32 %v1449
  %vm1456 = vmor %vm1454, %vm1455
  %v1457 = vsel %vm1456, %v1449, %v1453
  %v1458 = vand.u32 2147483647, %v769
  %vm1459 = vcmp.eq.f32.partialorder %v1458, 8.507059e+37
  %v1460 = vand.u32 %v769, 2147483648
  %v1461 = vor.u32 1.1754944e-38, %v1460
  %v1462 = vsel %vm1459, %v1461, %v1457
  %v1463 = vmul.f32 1.0, %v1462
  %v1464 = vrcp.pop %v770
  %v1465 = vmul.f32 %v770, %v1464
  %v1466 = vsub.f32 1.0, %v1465
  %v1467 = vmul.f32 %v1464, %v1466
  %v1468 = vadd.f32 %v1464, %v1467
  %vm1469 = vweird.f32 %v770
  %vm1470 = vweird.f32 %v1464
  %vm1471 = vmor %vm1469, %vm1470
  %v1472 = vsel %vm1471, %v1464, %v1468
  %v1473 = vand.u32 2147483647, %v770
  %vm1474 = vcmp.eq.f32.partialorder %v1473, 8.507059e+37
  %v1475 = vand.u32 %v770, 2147483648
  %v1476 = vor.u32 1.1754944e-38, %v1475
  %v1477 = vsel %vm1474, %v1476, %v1472
  %v1478 = vmul.f32 1.0, %v1477
  %v1479 = vrcp.pop %v771
  %v1480 = vmul.f32 %v771, %v1479
  %v1481 = vsub.f32 1.0, %v1480
  %v1482 = vmul.f32 %v1479, %v1481
  %v1483 = vadd.f32 %v1479, %v1482
  %vm1484 = vweird.f32 %v771
  %vm1485 = vweird.f32 %v1479
  %vm1486 = vmor %vm1484, %vm1485
  %v1487 = vsel %vm1486, %v1479, %v1483
  %v1488 = vand.u32 2147483647, %v771
  %vm1489 = vcmp.eq.f32.partialorder %v1488, 8.507059e+37
  %v1490 = vand.u32 %v771, 2147483648
  %v1491 = vor.u32 1.1754944e-38, %v1490
  %v1492 = vsel %vm1489, %v1491, %v1487
  %v1493 = vmul.f32 1.0, %v1492
  %v1494 = vrcp.pop %v772
  %v1495 = vmul.f32 %v772, %v1494
  %v1496 = vsub.f32 1.0, %v1495
  %v1497 = vmul.f32 %v1494, %v1496
  %v1498 = vadd.f32 %v1494, %v1497
  %vm1499 = vweird.f32 %v772
  %vm1500 = vweird.f32 %v1494
  %vm1501 = vmor %vm1499, %vm1500
  %v1502 = vsel %vm1501, %v1494, %v1498
  %v1503 = vand.u32 2147483647, %v772
  %vm1504 = vcmp.eq.f32.partialorder %v1503, 8.507059e+37
  %v1505 = vand.u32 %v772, 2147483648
  %v1506 = vor.u32 1.1754944e-38, %v1505
  %v1507 = vsel %vm1504, %v1506, %v1502
  %v1508 = vmul.f32 1.0, %v1507
  %v1509 = vrcp.pop %v773
  %v1510 = vmul.f32 %v773, %v1509
  %v1511 = vsub.f32 1.0, %v1510
  %v1512 = vmul.f32 %v1509, %v1511
  %v1513 = vadd.f32 %v1509, %v1512
  %vm1514 = vweird.f32 %v773
  %vm1515 = vweird.f32 %v1509
  %vm1516 = vmor %vm1514, %vm1515
  %v1517 = vsel %vm1516, %v1509, %v1513
  %v1518 = vand.u32 2147483647, %v773
  %vm1519 = vcmp.eq.f32.partialorder %v1518, 8.507059e+37
  %v1520 = vand.u32 %v773, 2147483648
  %v1521 = vor.u32 1.1754944e-38, %v1520
  %v1522 = vsel %vm1519, %v1521, %v1517
  %v1523 = vmul.f32 1.0, %v1522
  %v1524 = vrcp.pop %v774
  %v1525 = vmul.f32 %v774, %v1524
  %v1526 = vsub.f32 1.0, %v1525
  %v1527 = vmul.f32 %v1524, %v1526
  %v1528 = vadd.f32 %v1524, %v1527
  %vm1529 = vweird.f32 %v774
  %vm1530 = vweird.f32 %v1524
  %vm1531 = vmor %vm1529, %vm1530
  %v1532 = vsel %vm1531, %v1524, %v1528
  %v1533 = vand.u32 2147483647, %v774
  %vm1534 = vcmp.eq.f32.partialorder %v1533, 8.507059e+37
  %v1535 = vand.u32 %v774, 2147483648
  %v1536 = vor.u32 1.1754944e-38, %v1535
  %v1537 = vsel %vm1534, %v1536, %v1532
  %v1538 = vmul.f32 1.0, %v1537
  %v1539 = vrcp.pop %v775
  %v1540 = vmul.f32 %v775, %v1539
  %v1541 = vsub.f32 1.0, %v1540
  %v1542 = vmul.f32 %v1539, %v1541
  %v1543 = vadd.f32 %v1539, %v1542
  %vm1544 = vweird.f32 %v775
  %vm1545 = vweird.f32 %v1539
  %vm1546 = vmor %vm1544, %vm1545
  %v1547 = vsel %vm1546, %v1539, %v1543
  %v1548 = vand.u32 2147483647, %v775
  %vm1549 = vcmp.eq.f32.partialorder %v1548, 8.507059e+37
  %v1550 = vand.u32 %v775, 2147483648
  %v1551 = vor.u32 1.1754944e-38, %v1550
  %v1552 = vsel %vm1549, %v1551, %v1547
  %v1553 = vmul.f32 1.0, %v1552
  %v1554 = vrcp.pop %v776
  %v1555 = vmul.f32 %v776, %v1554
  %v1556 = vsub.f32 1.0, %v1555
  %v1557 = vmul.f32 %v1554, %v1556
  %v1558 = vadd.f32 %v1554, %v1557
  %vm1559 = vweird.f32 %v776
  %vm1560 = vweird.f32 %v1554
  %vm1561 = vmor %vm1559, %vm1560
  %v1562 = vsel %vm1561, %v1554, %v1558
  %v1563 = vand.u32 2147483647, %v776
  %vm1564 = vcmp.eq.f32.partialorder %v1563, 8.507059e+37
  %v1565 = vand.u32 %v776, 2147483648
  %v1566 = vor.u32 1.1754944e-38, %v1565
  %v1567 = vsel %vm1564, %v1566, %v1562
  %v1568 = vmul.f32 1.0, %v1567
  %v1569 = vrcp.pop %v777
  %v1570 = vmul.f32 %v777, %v1569
  %v1571 = vsub.f32 1.0, %v1570
  %v1572 = vmul.f32 %v1569, %v1571
  %v1573 = vadd.f32 %v1569, %v1572
  %vm1574 = vweird.f32 %v777
  %vm1575 = vweird.f32 %v1569
  %vm1576 = vmor %vm1574, %vm1575
  %v1577 = vsel %vm1576, %v1569, %v1573
  %v1578 = vand.u32 2147483647, %v777
  %vm1579 = vcmp.eq.f32.partialorder %v1578, 8.507059e+37
  %v1580 = vand.u32 %v777, 2147483648
  %v1581 = vor.u32 1.1754944e-38, %v1580
  %v1582 = vsel %vm1579, %v1581, %v1577
  %v1583 = vmul.f32 1.0, %v1582
  %v1584 = vrcp.pop %v778
  %v1585 = vmul.f32 %v778, %v1584
  %v1586 = vsub.f32 1.0, %v1585
  %v1587 = vmul.f32 %v1584, %v1586
  %v1588 = vadd.f32 %v1584, %v1587
  %vm1589 = vweird.f32 %v778
  %vm1590 = vweird.f32 %v1584
  %vm1591 = vmor %vm1589, %vm1590
  %v1592 = vsel %vm1591, %v1584, %v1588
  %v1593 = vand.u32 2147483647, %v778
  %vm1594 = vcmp.eq.f32.partialorder %v1593, 8.507059e+37
  %v1595 = vand.u32 %v778, 2147483648
  %v1596 = vor.u32 1.1754944e-38, %v1595
  %v1597 = vsel %vm1594, %v1596, %v1592
  %v1598 = vmul.f32 1.0, %v1597
  %v1599 = vrcp.pop %v779
  %v1600 = vmul.f32 %v779, %v1599
  %v1601 = vsub.f32 1.0, %v1600
  %v1602 = vmul.f32 %v1599, %v1601
  %v1603 = vadd.f32 %v1599, %v1602
  %vm1604 = vweird.f32 %v779
  %vm1605 = vweird.f32 %v1599
  %vm1606 = vmor %vm1604, %vm1605
  %v1607 = vsel %vm1606, %v1599, %v1603
  %v1608 = vand.u32 2147483647, %v779
  %vm1609 = vcmp.eq.f32.partialorder %v1608, 8.507059e+37
  %v1610 = vand.u32 %v779, 2147483648
  %v1611 = vor.u32 1.1754944e-38, %v1610
  %v1612 = vsel %vm1609, %v1611, %v1607
  %v1613 = vmul.f32 1.0, %v1612
  %v1614 = vrcp.pop %v780
  %v1615 = vmul.f32 %v780, %v1614
  %v1616 = vsub.f32 1.0, %v1615
  %v1617 = vmul.f32 %v1614, %v1616
  %v1618 = vadd.f32 %v1614, %v1617
  %vm1619 = vweird.f32 %v780
  %vm1620 = vweird.f32 %v1614
  %vm1621 = vmor %vm1619, %vm1620
  %v1622 = vsel %vm1621, %v1614, %v1618
  %v1623 = vand.u32 2147483647, %v780
  %vm1624 = vcmp.eq.f32.partialorder %v1623, 8.507059e+37
  %v1625 = vand.u32 %v780, 2147483648
  %v1626 = vor.u32 1.1754944e-38, %v1625
  %v1627 = vsel %vm1624, %v1626, %v1622
  %v1628 = vmul.f32 1.0, %v1627
  %v1629 = vrcp.pop %v781
  %v1630 = vmul.f32 %v781, %v1629
  %v1631 = vsub.f32 1.0, %v1630
  %v1632 = vmul.f32 %v1629, %v1631
  %v1633 = vadd.f32 %v1629, %v1632
  %vm1634 = vweird.f32 %v781
  %vm1635 = vweird.f32 %v1629
  %vm1636 = vmor %vm1634, %vm1635
  %v1637 = vsel %vm1636, %v1629, %v1633
  %v1638 = vand.u32 2147483647, %v781
  %vm1639 = vcmp.eq.f32.partialorder %v1638, 8.507059e+37
  %v1640 = vand.u32 %v781, 2147483648
  %v1641 = vor.u32 1.1754944e-38, %v1640
  %v1642 = vsel %vm1639, %v1641, %v1637
  %v1643 = vmul.f32 1.0, %v1642
  %v1644 = vrcp.pop %v782
  %v1645 = vmul.f32 %v782, %v1644
  %v1646 = vsub.f32 1.0, %v1645
  %v1647 = vmul.f32 %v1644, %v1646
  %v1648 = vadd.f32 %v1644, %v1647
  %vm1649 = vweird.f32 %v782
  %vm1650 = vweird.f32 %v1644
  %vm1651 = vmor %vm1649, %vm1650
  %v1652 = vsel %vm1651, %v1644, %v1648
  %v1653 = vand.u32 2147483647, %v782
  %vm1654 = vcmp.eq.f32.partialorder %v1653, 8.507059e+37
  %v1655 = vand.u32 %v782, 2147483648
  %v1656 = vor.u32 1.1754944e-38, %v1655
  %v1657 = vsel %vm1654, %v1656, %v1652
  %v1658 = vmul.f32 1.0, %v1657
  %v1659 = vrcp.pop %v783
  %v1660 = vmul.f32 %v783, %v1659
  %v1661 = vsub.f32 1.0, %v1660
  %v1662 = vmul.f32 %v1659, %v1661
  %v1663 = vadd.f32 %v1659, %v1662
  %vm1664 = vweird.f32 %v783
  %vm1665 = vweird.f32 %v1659
  %vm1666 = vmor %vm1664, %vm1665
  %v1667 = vsel %vm1666, %v1659, %v1663
  %v1668 = vand.u32 2147483647, %v783
  %vm1669 = vcmp.eq.f32.partialorder %v1668, 8.507059e+37
  %v1670 = vand.u32 %v783, 2147483648
  %v1671 = vor.u32 1.1754944e-38, %v1670
  %v1672 = vsel %vm1669, %v1671, %v1667
  %v1673 = vmul.f32 1.0, %v1672
  %v1674 = vrcp.pop %v784
  %v1675 = vmul.f32 %v784, %v1674
  %v1676 = vsub.f32 1.0, %v1675
  %v1677 = vmul.f32 %v1674, %v1676
  %v1678 = vadd.f32 %v1674, %v1677
  %vm1679 = vweird.f32 %v784
  %vm1680 = vweird.f32 %v1674
  %vm1681 = vmor %vm1679, %vm1680
  %v1682 = vsel %vm1681, %v1674, %v1678
  %v1683 = vand.u32 2147483647, %v784
  %vm1684 = vcmp.eq.f32.partialorder %v1683, 8.507059e+37
  %v1685 = vand.u32 %v784, 2147483648
  %v1686 = vor.u32 1.1754944e-38, %v1685
  %v1687 = vsel %vm1684, %v1686, %v1682
  %v1688 = vmul.f32 1.0, %v1687
  %v1689 = vrcp.pop %v785
  %v1690 = vmul.f32 %v785, %v1689
  %v1691 = vsub.f32 1.0, %v1690
  %v1692 = vmul.f32 %v1689, %v1691
  %v1693 = vadd.f32 %v1689, %v1692
  %vm1694 = vweird.f32 %v785
  %vm1695 = vweird.f32 %v1689
  %vm1696 = vmor %vm1694, %vm1695
  %v1697 = vsel %vm1696, %v1689, %v1693
  %v1698 = vand.u32 2147483647, %v785
  %vm1699 = vcmp.eq.f32.partialorder %v1698, 8.507059e+37
  %v1700 = vand.u32 %v785, 2147483648
  %v1701 = vor.u32 1.1754944e-38, %v1700
  %v1702 = vsel %vm1699, %v1701, %v1697
  %v1703 = vmul.f32 1.0, %v1702
  %v1704 = vrcp.pop %v786
  %v1705 = vmul.f32 %v786, %v1704
  %v1706 = vsub.f32 1.0, %v1705
  %v1707 = vmul.f32 %v1704, %v1706
  %v1708 = vadd.f32 %v1704, %v1707
  %vm1709 = vweird.f32 %v786
  %vm1710 = vweird.f32 %v1704
  %vm1711 = vmor %vm1709, %vm1710
  %v1712 = vsel %vm1711, %v1704, %v1708
  %v1713 = vand.u32 2147483647, %v786
  %vm1714 = vcmp.eq.f32.partialorder %v1713, 8.507059e+37
  %v1715 = vand.u32 %v786, 2147483648
  %v1716 = vor.u32 1.1754944e-38, %v1715
  %v1717 = vsel %vm1714, %v1716, %v1712
  %v1718 = vmul.f32 1.0, %v1717
  %v1719 = vrcp.pop %v787
  %v1720 = vmul.f32 %v787, %v1719
  %v1721 = vsub.f32 1.0, %v1720
  %v1722 = vmul.f32 %v1719, %v1721
  %v1723 = vadd.f32 %v1719, %v1722
  %vm1724 = vweird.f32 %v787
  %vm1725 = vweird.f32 %v1719
  %vm1726 = vmor %vm1724, %vm1725
  %v1727 = vsel %vm1726, %v1719, %v1723
  %v1728 = vand.u32 2147483647, %v787
  %vm1729 = vcmp.eq.f32.partialorder %v1728, 8.507059e+37
  %v1730 = vand.u32 %v787, 2147483648
  %v1731 = vor.u32 1.1754944e-38, %v1730
  %v1732 = vsel %vm1729, %v1731, %v1727
  %v1733 = vmul.f32 1.0, %v1732
  %v1734 = vrcp.pop %v788
  %v1735 = vmul.f32 %v788, %v1734
  %v1736 = vsub.f32 1.0, %v1735
  %v1737 = vmul.f32 %v1734, %v1736
  %v1738 = vadd.f32 %v1734, %v1737
  %vm1739 = vweird.f32 %v788
  %vm1740 = vweird.f32 %v1734
  %vm1741 = vmor %vm1739, %vm1740
  %v1742 = vsel %vm1741, %v1734, %v1738
  %v1743 = vand.u32 2147483647, %v788
  %vm1744 = vcmp.eq.f32.partialorder %v1743, 8.507059e+37
  %v1745 = vand.u32 %v788, 2147483648
  %v1746 = vor.u32 1.1754944e-38, %v1745
  %v1747 = vsel %vm1744, %v1746, %v1742
  %v1748 = vmul.f32 1.0, %v1747
  %v1749 = vmul.f32 %v374, %v803
  %v1750 = vmul.f32 %v376, %v818
  %v1751 = vmul.f32 %v379, %v833
  %v1752 = vmul.f32 %v381, %v848
  %v1753 = vmul.f32 %v384, %v863
  %v1754 = vmul.f32 %v386, %v878
  %v1755 = vmul.f32 %v389, %v893
  %v1756 = vmul.f32 %v391, %v908
  %v1757 = vmul.f32 %v394, %v923
  %v1758 = vmul.f32 %v396, %v938
  %v1759 = vmul.f32 %v399, %v953
  %v1760 = vmul.f32 %v401, %v968
  %v1761 = vmul.f32 %v404, %v983
  %v1762 = vmul.f32 %v406, %v998
  %v1763 = vmul.f32 %v409, %v1013
  %v1764 = vmul.f32 %v411, %v1028
  %v1765 = vmul.f32 %v414, %v1043
  %v1766 = vmul.f32 %v416, %v1058
  %v1767 = vmul.f32 %v419, %v1073
  %v1768 = vmul.f32 %v421, %v1088
  %v1769 = vmul.f32 %v424, %v1103
  %v1770 = vmul.f32 %v426, %v1118
  %v1771 = vmul.f32 %v429, %v1133
  %v1772 = vmul.f32 %v431, %v1148
  %v1773 = vmul.f32 %v434, %v1163
  %v1774 = vmul.f32 %v436, %v1178
  %v1775 = vmul.f32 %v439, %v1193
  %v1776 = vmul.f32 %v441, %v1208
  %v1777 = vmul.f32 %v444, %v1223
  %v1778 = vmul.f32 %v446, %v1238
  %v1779 = vmul.f32 %v449, %v1253
  %v1780 = vmul.f32 %v451, %v1268
  %v1781 = vmul.f32 %v454, %v1283
  %v1782 = vmul.f32 %v456, %v1298
  %v1783 = vmul.f32 %v459, %v1313
  %v1784 = vmul.f32 %v461, %v1328
  %v1785 = vmul.f32 %v464, %v1343
  %v1786 = vmul.f32 %v466, %v1358
  %v1787 = vmul.f32 %v469, %v1373
  %v1788 = vmul.f32 %v471, %v1388
  %v1789 = vmul.f32 %v474, %v1403
  %v1790 = vmul.f32 %v476, %v1418
  %v1791 = vmul.f32 %v479, %v1433
  %v1792 = vmul.f32 %v481, %v1448
  %v1793 = vmul.f32 %v484, %v1463
  %v1794 = vmul.f32 %v486, %v1478
  %v1795 = vmul.f32 %v489, %v1493
  %v1796 = vmul.f32 %v491, %v1508
  %v1797 = vmul.f32 %v494, %v1523
  %v1798 = vmul.f32 %v496, %v1538
  %v1799 = vmul.f32 %v499, %v1553
  %v1800 = vmul.f32 %v501, %v1568
  %v1801 = vmul.f32 %v504, %v1583
  %v1802 = vmul.f32 %v506, %v1598
  %v1803 = vmul.f32 %v509, %v1613
  %v1804 = vmul.f32 %v511, %v1628
  %v1805 = vmul.f32 %v514, %v1643
  %v1806 = vmul.f32 %v516, %v1658
  %v1807 = vmul.f32 %v519, %v1673
  %v1808 = vmul.f32 %v521, %v1688
  %v1809 = vmul.f32 %v524, %v1703
  %v1810 = vmul.f32 %v526, %v1718
  %v1811 = vmul.f32 %v529, %v1733
  %v1812 = vmul.f32 %v531, %v1748
  %vm1813 = vcmask 64512
  %1814 = vst.msk [vmem:[%s3] sm:$0xff] %vm1813, %v1749
  %1815 = vst.msk [vmem:[%s3 + $0x8] sm:$0xff] %vm1813, %v1750
  %1816 = vst.msk [vmem:[%s3 + $0x10] sm:$0xff] %vm1813, %v1751
  %1817 = vst.msk [vmem:[%s3 + $0x18] sm:$0xff] %vm1813, %v1752
  %1818 = vst.msk [vmem:[%s3 + $0x20] sm:$0xff] %vm1813, %v1753
  %1819 = vst.msk [vmem:[%s3 + $0x28] sm:$0xff] %vm1813, %v1754
  %1820 = vst.msk [vmem:[%s3 + $0x30] sm:$0xff] %vm1813, %v1755
  %1821 = vst.msk [vmem:[%s3 + $0x38] sm:$0xff] %vm1813, %v1756
  %1822 = vst.msk [vmem:[%s3 + $0x40] sm:$0xff] %vm1813, %v1757
  %1823 = vst.msk [vmem:[%s3 + $0x48] sm:$0xff] %vm1813, %v1758
  %1824 = vst.msk [vmem:[%s3 + $0x50] sm:$0xff] %vm1813, %v1759
  %1825 = vst.msk [vmem:[%s3 + $0x58] sm:$0xff] %vm1813, %v1760
  %1826 = vst.msk [vmem:[%s3 + $0x60] sm:$0xff] %vm1813, %v1761
  %1827 = vst.msk [vmem:[%s3 + $0x68] sm:$0xff] %vm1813, %v1762
  %1828 = vst.msk [vmem:[%s3 + $0x70] sm:$0xff] %vm1813, %v1763
  %1829 = vst.msk [vmem:[%s3 + $0x78] sm:$0xff] %vm1813, %v1764
  %1830 = vst.msk [vmem:[%s3 + $0x80] sm:$0xff] %vm1813, %v1765
  %1831 = vst.msk [vmem:[%s3 + $0x88] sm:$0xff] %vm1813, %v1766
  %1832 = vst.msk [vmem:[%s3 + $0x90] sm:$0xff] %vm1813, %v1767
  %1833 = vst.msk [vmem:[%s3 + $0x98] sm:$0xff] %vm1813, %v1768
  %1834 = vst.msk [vmem:[%s3 + $0xa0] sm:$0xff] %vm1813, %v1769
  %1835 = vst.msk [vmem:[%s3 + $0xa8] sm:$0xff] %vm1813, %v1770
  %1836 = vst.msk [vmem:[%s3 + $0xb0] sm:$0xff] %vm1813, %v1771
  %1837 = vst.msk [vmem:[%s3 + $0xb8] sm:$0xff] %vm1813, %v1772
  %1838 = vst.msk [vmem:[%s3 + $0xc0] sm:$0xff] %vm1813, %v1773
  %1839 = vst.msk [vmem:[%s3 + $0xc8] sm:$0xff] %vm1813, %v1774
  %1840 = vst.msk [vmem:[%s3 + $0xd0] sm:$0xff] %vm1813, %v1775
  %1841 = vst.msk [vmem:[%s3 + $0xd8] sm:$0xff] %vm1813, %v1776
  %1842 = vst.msk [vmem:[%s3 + $0xe0] sm:$0xff] %vm1813, %v1777
  %1843 = vst.msk [vmem:[%s3 + $0xe8] sm:$0xff] %vm1813, %v1778
  %1844 = vst.msk [vmem:[%s3 + $0xf0] sm:$0xff] %vm1813, %v1779
  %1845 = vst.msk [vmem:[%s3 + $0xf8] sm:$0xff] %vm1813, %v1780
  %1846 = vst.msk [vmem:[%s3 + $0x100] sm:$0xff] %vm1813, %v1781
  %1847 = vst.msk [vmem:[%s3 + $0x108] sm:$0xff] %vm1813, %v1782
  %1848 = vst.msk [vmem:[%s3 + $0x110] sm:$0xff] %vm1813, %v1783
  %1849 = vst.msk [vmem:[%s3 + $0x118] sm:$0xff] %vm1813, %v1784
  %1850 = vst.msk [vmem:[%s3 + $0x120] sm:$0xff] %vm1813, %v1785
  %1851 = vst.msk [vmem:[%s3 + $0x128] sm:$0xff] %vm1813, %v1786
  %1852 = vst.msk [vmem:[%s3 + $0x130] sm:$0xff] %vm1813, %v1787
  %1853 = vst.msk [vmem:[%s3 + $0x138] sm:$0xff] %vm1813, %v1788
  %1854 = vst.msk [vmem:[%s3 + $0x140] sm:$0xff] %vm1813, %v1789
  %1855 = vst.msk [vmem:[%s3 + $0x148] sm:$0xff] %vm1813, %v1790
  %1856 = vst.msk [vmem:[%s3 + $0x150] sm:$0xff] %vm1813, %v1791
  %1857 = vst.msk [vmem:[%s3 + $0x158] sm:$0xff] %vm1813, %v1792
  %1858 = vst.msk [vmem:[%s3 + $0x160] sm:$0xff] %vm1813, %v1793
  %1859 = vst.msk [vmem:[%s3 + $0x168] sm:$0xff] %vm1813, %v1794
  %1860 = vst.msk [vmem:[%s3 + $0x170] sm:$0xff] %vm1813, %v1795
  %1861 = vst.msk [vmem:[%s3 + $0x178] sm:$0xff] %vm1813, %v1796
  %1862 = vst.msk [vmem:[%s3 + $0x180] sm:$0xff] %vm1813, %v1797
  %1863 = vst.msk [vmem:[%s3 + $0x188] sm:$0xff] %vm1813, %v1798
  %1864 = vst.msk [vmem:[%s3 + $0x190] sm:$0xff] %vm1813, %v1799
  %1865 = vst.msk [vmem:[%s3 + $0x198] sm:$0xff] %vm1813, %v1800
  %1866 = vst.msk [vmem:[%s3 + $0x1a0] sm:$0xff] %vm1813, %v1801
  %1867 = vst.msk [vmem:[%s3 + $0x1a8] sm:$0xff] %vm1813, %v1802
  %1868 = vst.msk [vmem:[%s3 + $0x1b0] sm:$0xff] %vm1813, %v1803
  %1869 = vst.msk [vmem:[%s3 + $0x1b8] sm:$0xff] %vm1813, %v1804
  %1870 = vst.msk [vmem:[%s3 + $0x1c0] sm:$0xff] %vm1813, %v1805
  %1871 = vst.msk [vmem:[%s3 + $0x1c8] sm:$0xff] %vm1813, %v1806
  %1872 = vst.msk [vmem:[%s3 + $0x1d0] sm:$0xff] %vm1813, %v1807
  %1873 = vst.msk [vmem:[%s3 + $0x1d8] sm:$0xff] %vm1813, %v1808
  %1874 = vst.msk [vmem:[%s3 + $0x1e0] sm:$0xff] %vm1813, %v1809
  %1875 = vst.msk [vmem:[%s3 + $0x1e8] sm:$0xff] %vm1813, %v1810
  %1876 = vst.msk [vmem:[%s3 + $0x1f0] sm:$0xff] %vm1813, %v1811
  %1877 = vst.msk [vmem:[%s3 + $0x1f8] sm:$0xff] %vm1813, %v1812
  // Predicated region
  $region14: #{_lambda_.1} parent=0 // pred_check
    _
  $region15: #{_lambda_.1} parent=0 // pred_check_branch
    %1879 = sbr.rel (0) target = $region17
  $region16: #{_lambda_.1} parent=0 // pred_region
    _
  $region17: #{_lambda_.1} parent=0 // pred_fallthru
    _
  // Predicated region
  $region18: #{_lambda_.1} parent=0 // pred_check
    _
  $region19: #{_lambda_.1} parent=0 // pred_check_branch
    %1881 = sbr.rel (0) target = $region21
  $region20: #{_lambda_.1} parent=0 // pred_region
    _
  $region21: #{_lambda_.1} parent=0 // pred_fallthru
    _

</llo_original>
